<compile_context>
chip_gen: v6e
topology: v6e:2x2x1
jax: 0.10.0
libtpu: 0.0.40
codegen_flags: <defaults>
</compile_context>

<pallas_src>
import functools
import math

import jax
import jax.numpy as jnp
from jax.experimental import pallas as pl
from jax.experimental.pallas import tpu as pltpu


def _round_up(n, m):
    return (n + m - 1) // m * m


def _layernorm(v, eps=1e-5):
    """LayerNorm(elementwise_affine=False) over the last dim (all lanes valid)."""
    mu = jnp.mean(v, axis=-1, keepdims=True)
    d = v - mu
    var = jnp.mean(d * d, axis=-1, keepdims=True)
    return d * jax.lax.rsqrt(var + eps)


def _masked_layernorm(v, mask, count, eps=1e-5):
    """LayerNorm over the `count` valid lanes selected by `mask`.

    Two-pass variance E[(v-mu)^2] (no catastrophic cancellation), and padded
    lanes come out exactly zero (safe for a future time-axis carry)."""
    inv_n = 1.0 / float(count)
    v = jnp.where(mask, v, 0.0)
    mu = jnp.sum(v, axis=-1, keepdims=True) * inv_n
    d = jnp.where(mask, v - mu, 0.0)
    var = jnp.sum(d * d, axis=-1, keepdims=True) * inv_n
    return d * jax.lax.rsqrt(var + eps)


def gru_ln_kernel(x_ref, h_ref, wx_ref, bx_ref, wh_ref, bh_ref, out_ref,
                  *, hidden, hp):
    # x: (TB, K) bf16, h: (TB, Hp) f32 (feature-padded with zeros).
    # wx: (K, 3*Hp) bf16, wh: (Hp, 3*Hp) bf16, biases: (1, 3*Hp) f32.
    # Fused column layout: [ z-gate | r-gate | candidate ], each Hp lanes wide,
    # true features in lanes [0, hidden) of each block.
    h = h_ref[...]

    # Two fused MXU matmuls: bf16 operands, f32 accumulation.
    xw = jnp.dot(x_ref[...], wx_ref[...],
                 preferred_element_type=jnp.float32) + bx_ref[...]
    hw = jnp.dot(h.astype(jnp.bfloat16), wh_ref[...],
                 preferred_element_type=jnp.float32) + bh_ref[...]

    if hidden == hp:
        # Lane-aligned hidden: no iota / where / mask construction at all.
        ln_gate = _layernorm
        ln_cand = _layernorm
    else:
        lane = jax.lax.broadcasted_iota(jnp.int32, (1, hp), 1)
        m1 = lane < hidden                           # valid lanes of one Hp block
        m2 = jnp.concatenate([m1, m1], axis=-1)      # valid lanes of [z | r]
        ln_gate = functools.partial(_masked_layernorm, mask=m2, count=2 * hidden)
        ln_cand = functools.partial(_masked_layernorm, mask=m1, count=hidden)

    # Gate path: LN over the 2*hidden gate features of each linear layer.
    gates = jax.nn.sigmoid(ln_gate(xw[:, :2 * hp]) + ln_gate(hw[:, :2 * hp]))
    z_t = gates[:, :hp]
    r_t = gates[:, hp:2 * hp]

    # Candidate path: LN over hidden features of each half.
    h_hat = jnp.tanh(ln_cand(xw[:, 2 * hp:]) + r_t * ln_cand(hw[:, 2 * hp:]))

    # h_t = (1 - z)*h + z*h_hat  ==  h + z*(h_hat - h)
    # Padded lanes: h == 0 and h_hat == 0, so output lanes [hidden, Hp) are 0.
    out_ref[...] = (h + z_t * (h_hat - h)).astype(out_ref.dtype)


def pack_params(params, hidden, weight_dtype=jnp.bfloat16):
    """Fuse + lane-pad the four Linear layers into two MXU-friendly slabs.

    Returns dict with:
      wx: (input_size, 3*Hp)  = [w_i2h_z | w_i2h_r | w_hhW], zero-padded blocks
      wh: (Hp, 3*Hp)          = [w_h2h_z | w_h2h_r | w_hhU], rows padded to Hp
      bx, bh: (1, 3*Hp) matching bias rows (f32)
    """
    hp = _round_up(hidden, 128)

    def pad_cols(w):
        return jnp.pad(w, ((0, 0), (0, hp - w.shape[1])))

    wx = jnp.concatenate(
        [pad_cols(params["w_i2h"][:, :hidden]),
         pad_cols(params["w_i2h"][:, hidden:]),
         pad_cols(params["w_hhW"])], axis=1).astype(weight_dtype)

    wh = jnp.concatenate(
        [pad_cols(params["w_h2h"][:, :hidden]),
         pad_cols(params["w_h2h"][:, hidden:]),
         pad_cols(params["w_hhU"])], axis=1)
    wh = jnp.pad(wh, ((0, hp - hidden), (0, 0))).astype(weight_dtype)

    bx = jnp.concatenate(
        [pad_cols(params["b_i2h"][:, :hidden]),
         pad_cols(params["b_i2h"][:, hidden:]),
         pad_cols(params["b_hhW"])], axis=1).astype(jnp.float32)
    bh = jnp.concatenate(
        [pad_cols(params["b_h2h"][:, :hidden]),
         pad_cols(params["b_h2h"][:, hidden:]),
         pad_cols(params["b_hhU"])], axis=1).astype(jnp.float32)

    return {"wx": wx, "wh": wh, "bx": bx, "bh": bh, "hidden": hidden, "hp": hp}


def _vmem_capacity_bytes():
    """Best-effort physical VMEM (per TensorCore); conservative 64 MiB fallback."""
    try:
        return int(getattr(pltpu.get_tpu_info(), "vmem_capacity_bytes", 64 << 20))
    except Exception:
        return 64 << 20   # v7x per-TC size: safe lower bound on every chip


def _pick_tb(B, fixed_bytes, per_row_bytes, budget):
    """Batch tile: largest MXU-friendly candidate that fits `budget` and keeps
    batch-padding waste under ~15% (else the largest candidate that fits)."""
    b8 = _round_up(B, 8)
    if b8 <= 16:
        return b8                                    # tiny batch: single tile
    cands = [tb for tb in (512, 256, 128, 64, 32, 16)
             if tb <= b8 and fixed_bytes + tb * per_row_bytes <= budget]
    if not cands:
        return 16   # TODO(synk): K-reduction grid axis for the huge-hidden regime
    low_waste = [tb for tb in cands
                 if (_round_up(B, tb) - B) <= 0.15 * _round_up(B, tb)]
    return low_waste[0] if low_waste else cands[0]


def layernorm_gru_cell(x, h, packed):
    """Pallas forward of LayerNormGRUCell. x: (B, input_size), h: (B, hidden)."""
    B, hidden = h.shape
    input_size = x.shape[1]
    hp = packed["hp"]
    assert packed["hidden"] == hidden

    # --- VMEM budget: resident weights (single-buffered) + per-row tile costs ---
    fixed_bytes = ((packed["wx"].size + packed["wh"].size) * 2     # bf16 slabs
                   + (packed["bx"].size + packed["bh"].size) * 4)  # f32 biases
    per_row_bytes = (2 * input_size * 2      # x tile, bf16, double-buffered
                     + 2 * hp * 4            # h tile, f32, double-buffered
                     + 2 * hp * 4            # out tile, f32, double-buffered
                     + 12 * hp * 4)          # f32 intermediates (xw, hw, gates, ...)
    budget = int(0.9 * _vmem_capacity_bytes())

    tb = _pick_tb(B, fixed_bytes, per_row_bytes, budget)
    bp = _round_up(B, tb)
    grid = (bp // tb,)

    need = fixed_bytes + tb * per_row_bytes
    vmem_limit = int(max(32 << 20, min(budget, int(need * 1.25) + (4 << 20))))

    # bf16 I/O for x (matmul-only operand); h stays f32 for the final blend.
    x_p = jnp.pad(x, ((0, bp - B), (0, 0))).astype(jnp.bfloat16)
    h_p = jnp.pad(h, ((0, bp - B), (0, hp - hidden))).astype(jnp.float32)

    kernel = functools.partial(gru_ln_kernel, hidden=hidden, hp=hp)

    flops = 2 * bp * (input_size + hp) * (3 * hp)
    transcendentals = bp * (3 * hp + 4)  # sigmoid(2*Hp) + tanh(Hp) + 4 rsqrt / row
    bytes_accessed = (
        x_p.size * 2 + h_p.size * 4 + bp * hp * 4            # activations in/out
        + packed["wx"].size * 2 + packed["wh"].size * 2       # bf16 weights
        + packed["bx"].size * 4 + packed["bh"].size * 4)      # f32 biases

    def run(resident_mode):
        # resident_mode == pl.Buffered(1): the grid-invariant slabs are kept in a
        # single VMEM buffer instead of being double-buffered every grid step.
        return pl.pallas_call(
            kernel,
            out_shape=jax.ShapeDtypeStruct((bp, hp), jnp.float32),
            grid=grid,
            in_specs=[
                pl.BlockSpec((tb, input_size), lambda i: (i, 0)),   # x tile
                pl.BlockSpec((tb, hp), lambda i: (i, 0)),           # h tile
                pl.BlockSpec((input_size, 3 * hp), lambda i: (0, 0),
                             pipeline_mode=resident_mode),          # wx (resident)
                pl.BlockSpec((1, 3 * hp), lambda i: (0, 0),
                             pipeline_mode=resident_mode),          # bx (resident)
                pl.BlockSpec((hp, 3 * hp), lambda i: (0, 0),
                             pipeline_mode=resident_mode),          # wh (resident)
                pl.BlockSpec((1, 3 * hp), lambda i: (0, 0),
                             pipeline_mode=resident_mode),          # bh (resident)
            ],
            out_specs=pl.BlockSpec((tb, hp), lambda i: (i, 0)),
            compiler_params=pltpu.CompilerParams(
                dimension_semantics=("parallel",),
                vmem_limit_bytes=vmem_limit),
            cost_estimate=pl.CostEstimate(
                flops=flops,
                transcendentals=transcendentals,
                bytes_accessed=bytes_accessed),
        )(x_p, h_p, packed["wx"], packed["bx"], packed["wh"], packed["bh"])

    try:
        out_p = run(pl.Buffered(1))
    except Exception:
        # Defensive fallback: if this jax build rejects single-buffering of the
        # grid-invariant operands, use the default (double-buffered) pipelining.
        out_p = run(None)

    return out_p[:B, :hidden].astype(x.dtype)


def init_params(key, input_size, hidden_size, dtype=jnp.float32):
    """Deterministic init matching reset_parameters(): U(-std, std), std=1/sqrt(H).

    Weights are stored pre-transposed as (in_features, out_features)."""
    std = 1.0 / math.sqrt(hidden_size)
    ks = jax.random.split(key, 8)

    def u(k, shape):
        return jax.random.uniform(k, shape, dtype=dtype, minval=-std, maxval=std)

    return {
        "w_i2h": u(ks[0], (input_size, 2 * hidden_size)),
        "b_i2h": u(ks[1], (1, 2 * hidden_size)),
        "w_h2h": u(ks[2], (hidden_size, 2 * hidden_size)),
        "b_h2h": u(ks[3], (1, 2 * hidden_size)),
        "w_hhW": u(ks[4], (input_size, hidden_size)),
        "b_hhW": u(ks[5], (1, hidden_size)),
        "w_hhU": u(ks[6], (hidden_size, hidden_size)),
        "b_hhU": u(ks[7], (1, hidden_size)),
    }


def _layernorm_ref(v, eps=1e-5):
    mu = jnp.mean(v, axis=-1, keepdims=True)
    var = jnp.mean((v - mu) * (v - mu), axis=-1, keepdims=True)
    return (v - mu) * jax.lax.rsqrt(var + eps)


def reference_forward(x, h, params):
    """Pure-JAX f32 reference mirroring the PyTorch module semantics."""
    hidden = h.shape[-1]
    i2h = _layernorm_ref(x @ params["w_i2h"] + params["b_i2h"])
    h2h = _layernorm_ref(h @ params["w_h2h"] + params["b_h2h"])
    gates = jax.nn.sigmoid(i2h + h2h)
    z_t = gates[:, :hidden]
    r_t = gates[:, -hidden:]
    h_hat_first = _layernorm_ref(x @ params["w_hhW"] + params["b_hhW"])
    h_hat_last = _layernorm_ref(h @ params["w_hhU"] + params["b_hhU"])
    h_hat = jnp.tanh(h_hat_first + r_t * h_hat_last)
    return (1.0 - z_t) * h + z_t * h_hat


if __name__ == "__main__":
    B, input_size, hidden_size = 4, 16, 32

    key = jax.random.PRNGKey(0)
    k_param, k_x, k_h = jax.random.split(key, 3)

    params = init_params(k_param, input_size, hidden_size)
    x = jax.random.normal(k_x, (B, input_size), dtype=jnp.float32)
    h = jax.random.normal(k_h, (B, hidden_size), dtype=jnp.float32)

    packed = pack_params(params, hidden_size)   # one-time weight fusion/padding

    h_t = layernorm_gru_cell(x, h, packed)
    jax.block_until_ready(h_t)

    ref = reference_forward(x, h, params)
    assert h_t.shape == (B, hidden_size)
    # Tolerance loosened vs. the pure-f32 reference because the kernel feeds the
    # MXU with bf16 operands (f32 accumulation + f32 elementwise math).
    assert jnp.allclose(h_t, ref, atol=5e-2, rtol=5e-2), "mismatch vs JAX reference"

    print("KERNEL_OK")
</pallas_src>

<mosaic_0001>
module attributes {stable_mosaic.version = 11 : i64} {
  func.func @gru_ln_kernel(%arg0: i32, %arg1: memref<8x16xbf16, #tpu.memory_space<vmem>>, %arg2: memref<8x128xf32, #tpu.memory_space<vmem>>, %arg3: memref<16x384xbf16, #tpu.memory_space<vmem>>, %arg4: memref<1x384xf32, #tpu.memory_space<vmem>>, %arg5: memref<128x384xbf16, #tpu.memory_space<vmem>>, %arg6: memref<1x384xf32, #tpu.memory_space<vmem>>, %arg7: memref<8x128xf32, #tpu.memory_space<vmem>>) attributes {dimension_semantics = [#tpu.dimension_semantics<parallel>], iteration_bounds = array<i64: 1>, scalar_prefetch = 0 : i64, scratch_operands = 0 : i64, tpu.core_type = #tpu.core_type<tc>, window_params = [{transform_indices = @transform_0, window_bounds = array<i64: 8, 16>}, {transform_indices = @transform_1, window_bounds = array<i64: 8, 128>}, {pipeline_mode = #tpu.pipeline_mode<synchronous>, transform_indices = @transform_2, window_bounds = array<i64: 16, 384>}, {pipeline_mode = #tpu.pipeline_mode<synchronous>, transform_indices = @transform_3, window_bounds = array<i64: 1, 384>}, {pipeline_mode = #tpu.pipeline_mode<synchronous>, transform_indices = @transform_4, window_bounds = array<i64: 128, 384>}, {pipeline_mode = #tpu.pipeline_mode<synchronous>, transform_indices = @transform_5, window_bounds = array<i64: 1, 384>}, {transform_indices = @transform_6, window_bounds = array<i64: 8, 128>}]} {
    %c0 = arith.constant 0 : index
    %c0_0 = arith.constant 0 : index
    %0 = vector.load %arg2[%c0, %c0_0] : memref<8x128xf32, #tpu.memory_space<vmem>>, vector<8x128xf32>
    %c0_1 = arith.constant 0 : index
    %c0_2 = arith.constant 0 : index
    %1 = vector.load %arg1[%c0_1, %c0_2] : memref<8x16xbf16, #tpu.memory_space<vmem>>, vector<8x16xbf16>
    %c0_3 = arith.constant 0 : index
    %c0_4 = arith.constant 0 : index
    %2 = vector.load %arg3[%c0_3, %c0_4] : memref<16x384xbf16, #tpu.memory_space<vmem>>, vector<16x384xbf16>
    %cst = arith.constant dense<0.000000e+00> : vector<8x384xf32>
    %3 = tpu.matmul %1, %2, %cst {dimension_numbers = #tpu.dot_dimension_numbers<[1], [0], [0], [1], [0, 0, 1, 1], [], []>} : vector<8x16xbf16>, vector<16x384xbf16>, vector<8x384xf32> -> vector<8x384xf32>
    %c0_5 = arith.constant 0 : index
    %c0_6 = arith.constant 0 : index
    %4 = vector.load %arg4[%c0_5, %c0_6] : memref<1x384xf32, #tpu.memory_space<vmem>>, vector<1x384xf32>
    %5 = vector.broadcast %4 : vector<1x384xf32> to vector<8x384xf32>
    %6 = arith.addf %3, %5 : vector<8x384xf32>
    %7 = arith.truncf %0 : vector<8x128xf32> to vector<8x128xbf16>
    %c0_7 = arith.constant 0 : index
    %c0_8 = arith.constant 0 : index
    %8 = vector.load %arg5[%c0_7, %c0_8] : memref<128x384xbf16, #tpu.memory_space<vmem>>, vector<128x384xbf16>
    %cst_9 = arith.constant dense<0.000000e+00> : vector<8x384xf32>
    %9 = tpu.matmul %7, %8, %cst_9 {dimension_numbers = #tpu.dot_dimension_numbers<[1], [0], [0], [1], [0, 0, 1, 1], [], []>} : vector<8x128xbf16>, vector<128x384xbf16>, vector<8x384xf32> -> vector<8x384xf32>
    %c0_10 = arith.constant 0 : index
    %c0_11 = arith.constant 0 : index
    %10 = vector.load %arg6[%c0_10, %c0_11] : memref<1x384xf32, #tpu.memory_space<vmem>>, vector<1x384xf32>
    %11 = vector.broadcast %10 : vector<1x384xf32> to vector<8x384xf32>
    %12 = arith.addf %9, %11 : vector<8x384xf32>
    %13 = tpu.iota {dimensions = array<i32: 1>} : vector<1x128xi32>
    %c32_i32 = arith.constant 32 : i32
    %14 = vector.broadcast %c32_i32 : i32 to vector<1x128xi32>
    %15 = arith.cmpi slt, %13, %14 : vector<1x128xi32>
    %16 = tpu.concatenate %15, %15 in 1 : vector<1x128xi1>, vector<1x128xi1> -> vector<1x256xi1>
    %17 = vector.extract_strided_slice %6 {offsets = [0, 0], sizes = [8, 256], strides = [1, 1]} : vector<8x384xf32> to vector<8x256xf32>
    %cst_12 = arith.constant 0.000000e+00 : f32
    %18 = vector.shape_cast %16 : vector<1x256xi1> to vector<1x256xi1>
    %19 = vector.broadcast %18 : vector<1x256xi1> to vector<8x256xi1>
    %20 = vector.broadcast %cst_12 : f32 to vector<8x256xf32>
    %21 = arith.select %19, %17, %20 : vector<8x256xi1>, vector<8x256xf32>
    %cst_13 = arith.constant dense<0.000000e+00> : vector<8xf32>
    %22 = vector.multi_reduction <add>, %21, %cst_13 [1] : vector<8x256xf32> to vector<8xf32>
    %23 = vector.shape_cast %22 : vector<8xf32> to vector<8x1xf32>
    %cst_14 = arith.constant 1.562500e-02 : f32
    %24 = vector.broadcast %cst_14 : f32 to vector<8x1xf32>
    %25 = arith.mulf %23, %24 : vector<8x1xf32>
    %26 = vector.broadcast %25 : vector<8x1xf32> to vector<8x256xf32>
    %27 = arith.subf %21, %26 : vector<8x256xf32>
    %cst_15 = arith.constant 0.000000e+00 : f32
    %28 = vector.shape_cast %16 : vector<1x256xi1> to vector<1x256xi1>
    %29 = vector.broadcast %28 : vector<1x256xi1> to vector<8x256xi1>
    %30 = vector.broadcast %cst_15 : f32 to vector<8x256xf32>
    %31 = arith.select %29, %27, %30 : vector<8x256xi1>, vector<8x256xf32>
    %32 = arith.mulf %31, %31 : vector<8x256xf32>
    %cst_16 = arith.constant dense<0.000000e+00> : vector<8xf32>
    %33 = vector.multi_reduction <add>, %32, %cst_16 [1] : vector<8x256xf32> to vector<8xf32>
    %34 = vector.shape_cast %33 : vector<8xf32> to vector<8x1xf32>
    %cst_17 = arith.constant 1.562500e-02 : f32
    %35 = vector.broadcast %cst_17 : f32 to vector<8x1xf32>
    %36 = arith.mulf %34, %35 : vector<8x1xf32>
    %cst_18 = arith.constant 9.99999974E-6 : f32
    %37 = vector.broadcast %cst_18 : f32 to vector<8x1xf32>
    %38 = arith.addf %36, %37 : vector<8x1xf32>
    %39 = math.rsqrt %38 : vector<8x1xf32>
    %40 = vector.broadcast %39 : vector<8x1xf32> to vector<8x256xf32>
    %41 = arith.mulf %31, %40 : vector<8x256xf32>
    %42 = vector.extract_strided_slice %12 {offsets = [0, 0], sizes = [8, 256], strides = [1, 1]} : vector<8x384xf32> to vector<8x256xf32>
    %cst_19 = arith.constant 0.000000e+00 : f32
    %43 = vector.shape_cast %16 : vector<1x256xi1> to vector<1x256xi1>
    %44 = vector.broadcast %43 : vector<1x256xi1> to vector<8x256xi1>
    %45 = vector.broadcast %cst_19 : f32 to vector<8x256xf32>
    %46 = arith.select %44, %42, %45 : vector<8x256xi1>, vector<8x256xf32>
    %cst_20 = arith.constant dense<0.000000e+00> : vector<8xf32>
    %47 = vector.multi_reduction <add>, %46, %cst_20 [1] : vector<8x256xf32> to vector<8xf32>
    %48 = vector.shape_cast %47 : vector<8xf32> to vector<8x1xf32>
    %cst_21 = arith.constant 1.562500e-02 : f32
    %49 = vector.broadcast %cst_21 : f32 to vector<8x1xf32>
    %50 = arith.mulf %48, %49 : vector<8x1xf32>
    %51 = vector.broadcast %50 : vector<8x1xf32> to vector<8x256xf32>
    %52 = arith.subf %46, %51 : vector<8x256xf32>
    %cst_22 = arith.constant 0.000000e+00 : f32
    %53 = vector.shape_cast %16 : vector<1x256xi1> to vector<1x256xi1>
    %54 = vector.broadcast %53 : vector<1x256xi1> to vector<8x256xi1>
    %55 = vector.broadcast %cst_22 : f32 to vector<8x256xf32>
    %56 = arith.select %54, %52, %55 : vector<8x256xi1>, vector<8x256xf32>
    %57 = arith.mulf %56, %56 : vector<8x256xf32>
    %cst_23 = arith.constant dense<0.000000e+00> : vector<8xf32>
    %58 = vector.multi_reduction <add>, %57, %cst_23 [1] : vector<8x256xf32> to vector<8xf32>
    %59 = vector.shape_cast %58 : vector<8xf32> to vector<8x1xf32>
    %cst_24 = arith.constant 1.562500e-02 : f32
    %60 = vector.broadcast %cst_24 : f32 to vector<8x1xf32>
    %61 = arith.mulf %59, %60 : vector<8x1xf32>
    %cst_25 = arith.constant 9.99999974E-6 : f32
    %62 = vector.broadcast %cst_25 : f32 to vector<8x1xf32>
    %63 = arith.addf %61, %62 : vector<8x1xf32>
    %64 = math.rsqrt %63 : vector<8x1xf32>
    %65 = vector.broadcast %64 : vector<8x1xf32> to vector<8x256xf32>
    %66 = arith.mulf %56, %65 : vector<8x256xf32>
    %67 = arith.addf %41, %66 : vector<8x256xf32>
    %68 = arith.negf %67 : vector<8x256xf32>
    %69 = math.exp %68 : vector<8x256xf32>
    %cst_26 = arith.constant 1.000000e+00 : f32
    %70 = vector.broadcast %cst_26 : f32 to vector<8x256xf32>
    %71 = arith.addf %70, %69 : vector<8x256xf32>
    %72 = arith.divf %70, %71 : vector<8x256xf32>
    %73 = vector.extract_strided_slice %72 {offsets = [0, 0], sizes = [8, 128], strides = [1, 1]} : vector<8x256xf32> to vector<8x128xf32>
    %74 = vector.extract_strided_slice %72 {offsets = [0, 128], sizes = [8, 128], strides = [1, 1]} : vector<8x256xf32> to vector<8x128xf32>
    %75 = vector.extract_strided_slice %6 {offsets = [0, 256], sizes = [8, 128], strides = [1, 1]} : vector<8x384xf32> to vector<8x128xf32>
    %cst_27 = arith.constant 0.000000e+00 : f32
    %76 = vector.shape_cast %15 : vector<1x128xi1> to vector<1x128xi1>
    %77 = vector.broadcast %76 : vector<1x128xi1> to vector<8x128xi1>
    %78 = vector.broadcast %cst_27 : f32 to vector<8x128xf32>
    %79 = arith.select %77, %75, %78 : vector<8x128xi1>, vector<8x128xf32>
    %cst_28 = arith.constant dense<0.000000e+00> : vector<8xf32>
    %80 = vector.multi_reduction <add>, %79, %cst_28 [1] : vector<8x128xf32> to vector<8xf32>
    %81 = vector.shape_cast %80 : vector<8xf32> to vector<8x1xf32>
    %cst_29 = arith.constant 3.125000e-02 : f32
    %82 = vector.broadcast %cst_29 : f32 to vector<8x1xf32>
    %83 = arith.mulf %81, %82 : vector<8x1xf32>
    %84 = vector.broadcast %83 : vector<8x1xf32> to vector<8x128xf32>
    %85 = arith.subf %79, %84 : vector<8x128xf32>
    %cst_30 = arith.constant 0.000000e+00 : f32
    %86 = vector.shape_cast %15 : vector<1x128xi1> to vector<1x128xi1>
    %87 = vector.broadcast %86 : vector<1x128xi1> to vector<8x128xi1>
    %88 = vector.broadcast %cst_30 : f32 to vector<8x128xf32>
    %89 = arith.select %87, %85, %88 : vector<8x128xi1>, vector<8x128xf32>
    %90 = arith.mulf %89, %89 : vector<8x128xf32>
    %cst_31 = arith.constant dense<0.000000e+00> : vector<8xf32>
    %91 = vector.multi_reduction <add>, %90, %cst_31 [1] : vector<8x128xf32> to vector<8xf32>
    %92 = vector.shape_cast %91 : vector<8xf32> to vector<8x1xf32>
    %cst_32 = arith.constant 3.125000e-02 : f32
    %93 = vector.broadcast %cst_32 : f32 to vector<8x1xf32>
    %94 = arith.mulf %92, %93 : vector<8x1xf32>
    %cst_33 = arith.constant 9.99999974E-6 : f32
    %95 = vector.broadcast %cst_33 : f32 to vector<8x1xf32>
    %96 = arith.addf %94, %95 : vector<8x1xf32>
    %97 = math.rsqrt %96 : vector<8x1xf32>
    %98 = vector.broadcast %97 : vector<8x1xf32> to vector<8x128xf32>
    %99 = arith.mulf %89, %98 : vector<8x128xf32>
    %100 = vector.extract_strided_slice %12 {offsets = [0, 256], sizes = [8, 128], strides = [1, 1]} : vector<8x384xf32> to vector<8x128xf32>
    %cst_34 = arith.constant 0.000000e+00 : f32
    %101 = vector.shape_cast %15 : vector<1x128xi1> to vector<1x128xi1>
    %102 = vector.broadcast %101 : vector<1x128xi1> to vector<8x128xi1>
    %103 = vector.broadcast %cst_34 : f32 to vector<8x128xf32>
    %104 = arith.select %102, %100, %103 : vector<8x128xi1>, vector<8x128xf32>
    %cst_35 = arith.constant dense<0.000000e+00> : vector<8xf32>
    %105 = vector.multi_reduction <add>, %104, %cst_35 [1] : vector<8x128xf32> to vector<8xf32>
    %106 = vector.shape_cast %105 : vector<8xf32> to vector<8x1xf32>
    %cst_36 = arith.constant 3.125000e-02 : f32
    %107 = vector.broadcast %cst_36 : f32 to vector<8x1xf32>
    %108 = arith.mulf %106, %107 : vector<8x1xf32>
    %109 = vector.broadcast %108 : vector<8x1xf32> to vector<8x128xf32>
    %110 = arith.subf %104, %109 : vector<8x128xf32>
    %cst_37 = arith.constant 0.000000e+00 : f32
    %111 = vector.shape_cast %15 : vector<1x128xi1> to vector<1x128xi1>
    %112 = vector.broadcast %111 : vector<1x128xi1> to vector<8x128xi1>
    %113 = vector.broadcast %cst_37 : f32 to vector<8x128xf32>
    %114 = arith.select %112, %110, %113 : vector<8x128xi1>, vector<8x128xf32>
    %115 = arith.mulf %114, %114 : vector<8x128xf32>
    %cst_38 = arith.constant dense<0.000000e+00> : vector<8xf32>
    %116 = vector.multi_reduction <add>, %115, %cst_38 [1] : vector<8x128xf32> to vector<8xf32>
    %117 = vector.shape_cast %116 : vector<8xf32> to vector<8x1xf32>
    %cst_39 = arith.constant 3.125000e-02 : f32
    %118 = vector.broadcast %cst_39 : f32 to vector<8x1xf32>
    %119 = arith.mulf %117, %118 : vector<8x1xf32>
    %cst_40 = arith.constant 9.99999974E-6 : f32
    %120 = vector.broadcast %cst_40 : f32 to vector<8x1xf32>
    %121 = arith.addf %119, %120 : vector<8x1xf32>
    %122 = math.rsqrt %121 : vector<8x1xf32>
    %123 = vector.broadcast %122 : vector<8x1xf32> to vector<8x128xf32>
    %124 = arith.mulf %114, %123 : vector<8x128xf32>
    %125 = arith.mulf %74, %124 : vector<8x128xf32>
    %126 = arith.addf %99, %125 : vector<8x128xf32>
    %127 = math.tanh %126 : vector<8x128xf32>
    %128 = arith.subf %127, %0 : vector<8x128xf32>
    %129 = arith.mulf %73, %128 : vector<8x128xf32>
    %130 = arith.addf %0, %129 : vector<8x128xf32>
    %c0_41 = arith.constant 0 : index
    %c0_42 = arith.constant 0 : index
    %131 = vector.load %arg7[%c0_41, %c0_42] : memref<8x128xf32, #tpu.memory_space<vmem>>, vector<8x128xf32>
    tpu.vector_store %arg7[%c0_41, %c0_42], %130 {strides = array<i32>} : memref<8x128xf32, #tpu.memory_space<vmem>>, vector<8x128xf32>,
    return
  }
  func.func @transform_0(%arg0: i32) -> (i32, i32) {
    %c0_i32 = arith.constant 0 : i32
    %c0_i32_0 = arith.constant 0 : i32
    return %arg0, %c0_i32 : i32, i32
  }
  func.func @transform_1(%arg0: i32) -> (i32, i32) {
    %c0_i32 = arith.constant 0 : i32
    %c0_i32_0 = arith.constant 0 : i32
    return %arg0, %c0_i32 : i32, i32
  }
  func.func @transform_2(%arg0: i32) -> (i32, i32) {
    %c0_i32 = arith.constant 0 : i32
    %c0_i32_0 = arith.constant 0 : i32
    %c0_i32_1 = arith.constant 0 : i32
    return %c0_i32, %c0_i32_0 : i32, i32
  }
  func.func @transform_3(%arg0: i32) -> (i32, i32) {
    %c0_i32 = arith.constant 0 : i32
    %c0_i32_0 = arith.constant 0 : i32
    %c0_i32_1 = arith.constant 0 : i32
    return %c0_i32, %c0_i32_0 : i32, i32
  }
  func.func @transform_4(%arg0: i32) -> (i32, i32) {
    %c0_i32 = arith.constant 0 : i32
    %c0_i32_0 = arith.constant 0 : i32
    %c0_i32_1 = arith.constant 0 : i32
    return %c0_i32, %c0_i32_0 : i32, i32
  }
  func.func @transform_5(%arg0: i32) -> (i32, i32) {
    %c0_i32 = arith.constant 0 : i32
    %c0_i32_0 = arith.constant 0 : i32
    %c0_i32_1 = arith.constant 0 : i32
    return %c0_i32, %c0_i32_0 : i32, i32
  }
  func.func @transform_6(%arg0: i32) -> (i32, i32) {
    %c0_i32 = arith.constant 0 : i32
    %c0_i32_0 = arith.constant 0 : i32
    return %arg0, %c0_i32 : i32, i32
  }
}

module attributes {stable_mosaic.version = 11 : i64} {
  func.func @gru_ln_kernel(%arg0: i32, %arg1: memref<8x16xbf16, #tpu.memory_space<vmem>>, %arg2: memref<8x128xf32, #tpu.memory_space<vmem>>, %arg3: memref<16x384xbf16, #tpu.memory_space<vmem>>, %arg4: memref<1x384xf32, #tpu.memory_space<vmem>>, %arg5: memref<128x384xbf16, #tpu.memory_space<vmem>>, %arg6: memref<1x384xf32, #tpu.memory_space<vmem>>, %arg7: memref<8x128xf32, #tpu.memory_space<vmem>>) attributes {dimension_semantics = [#tpu.dimension_semantics<parallel>], iteration_bounds = array<i64: 1>, scalar_prefetch = 0 : i64, scratch_operands = 0 : i64, tpu.core_type = #tpu.core_type<tc>, window_params = [{transform_indices = @transform_0, window_bounds = array<i64: 8, 16>}, {transform_indices = @transform_1, window_bounds = array<i64: 8, 128>}, {pipeline_mode = #tpu.pipeline_mode<synchronous>, transform_indices = @transform_2, window_bounds = array<i64: 16, 384>}, {pipeline_mode = #tpu.pipeline_mode<synchronous>, transform_indices = @transform_3, window_bounds = array<i64: 1, 384>}, {pipeline_mode = #tpu.pipeline_mode<synchronous>, transform_indices = @transform_4, window_bounds = array<i64: 128, 384>}, {pipeline_mode = #tpu.pipeline_mode<synchronous>, transform_indices = @transform_5, window_bounds = array<i64: 1, 384>}, {transform_indices = @transform_6, window_bounds = array<i64: 8, 128>}]} {
    %c0 = arith.constant 0 : index
    %c0_0 = arith.constant 0 : index
    %0 = vector.load %arg2[%c0, %c0_0] : memref<8x128xf32, #tpu.memory_space<vmem>>, vector<8x128xf32>
    %c0_1 = arith.constant 0 : index
    %c0_2 = arith.constant 0 : index
    %1 = vector.load %arg1[%c0_1, %c0_2] : memref<8x16xbf16, #tpu.memory_space<vmem>>, vector<8x16xbf16>
    %c0_3 = arith.constant 0 : index
    %c0_4 = arith.constant 0 : index
    %2 = vector.load %arg3[%c0_3, %c0_4] : memref<16x384xbf16, #tpu.memory_space<vmem>>, vector<16x384xbf16>
    %cst = arith.constant dense<0.000000e+00> : vector<8x384xf32>
    %3 = tpu.matmul %1, %2, %cst {dimension_numbers = #tpu.dot_dimension_numbers<[1], [0], [0], [1], [0, 0, 1, 1], [], []>} : vector<8x16xbf16>, vector<16x384xbf16>, vector<8x384xf32> -> vector<8x384xf32>
    %c0_5 = arith.constant 0 : index
    %c0_6 = arith.constant 0 : index
    %4 = vector.load %arg4[%c0_5, %c0_6] : memref<1x384xf32, #tpu.memory_space<vmem>>, vector<1x384xf32>
    %5 = vector.broadcast %4 : vector<1x384xf32> to vector<8x384xf32>
    %6 = arith.addf %3, %5 : vector<8x384xf32>
    %7 = arith.truncf %0 : vector<8x128xf32> to vector<8x128xbf16>
    %c0_7 = arith.constant 0 : index
    %c0_8 = arith.constant 0 : index
    %8 = vector.load %arg5[%c0_7, %c0_8] : memref<128x384xbf16, #tpu.memory_space<vmem>>, vector<128x384xbf16>
    %cst_9 = arith.constant dense<0.000000e+00> : vector<8x384xf32>
    %9 = tpu.matmul %7, %8, %cst_9 {dimension_numbers = #tpu.dot_dimension_numbers<[1], [0], [0], [1], [0, 0, 1, 1], [], []>} : vector<8x128xbf16>, vector<128x384xbf16>, vector<8x384xf32> -> vector<8x384xf32>
    %c0_10 = arith.constant 0 : index
    %c0_11 = arith.constant 0 : index
    %10 = vector.load %arg6[%c0_10, %c0_11] : memref<1x384xf32, #tpu.memory_space<vmem>>, vector<1x384xf32>
    %11 = vector.broadcast %10 : vector<1x384xf32> to vector<8x384xf32>
    %12 = arith.addf %9, %11 : vector<8x384xf32>
    %13 = tpu.iota {dimensions = array<i32: 1>} : vector<1x128xi32>
    %c32_i32 = arith.constant 32 : i32
    %14 = vector.broadcast %c32_i32 : i32 to vector<1x128xi32>
    %15 = arith.cmpi slt, %13, %14 : vector<1x128xi32>
    %16 = tpu.concatenate %15, %15 in 1 : vector<1x128xi1>, vector<1x128xi1> -> vector<1x256xi1>
    %17 = vector.extract_strided_slice %6 {offsets = [0, 0], sizes = [8, 256], strides = [1, 1]} : vector<8x384xf32> to vector<8x256xf32>
    %cst_12 = arith.constant 0.000000e+00 : f32
    %18 = vector.shape_cast %16 : vector<1x256xi1> to vector<1x256xi1>
    %19 = vector.broadcast %18 : vector<1x256xi1> to vector<8x256xi1>
    %20 = vector.broadcast %cst_12 : f32 to vector<8x256xf32>
    %21 = arith.select %19, %17, %20 : vector<8x256xi1>, vector<8x256xf32>
    %cst_13 = arith.constant dense<0.000000e+00> : vector<8xf32>
    %22 = vector.multi_reduction <add>, %21, %cst_13 [1] : vector<8x256xf32> to vector<8xf32>
    %23 = vector.shape_cast %22 : vector<8xf32> to vector<8x1xf32>
    %cst_14 = arith.constant 1.562500e-02 : f32
    %24 = vector.broadcast %cst_14 : f32 to vector<8x1xf32>
    %25 = arith.mulf %23, %24 : vector<8x1xf32>
    %26 = vector.broadcast %25 : vector<8x1xf32> to vector<8x256xf32>
    %27 = arith.subf %21, %26 : vector<8x256xf32>
    %cst_15 = arith.constant 0.000000e+00 : f32
    %28 = vector.shape_cast %16 : vector<1x256xi1> to vector<1x256xi1>
    %29 = vector.broadcast %28 : vector<1x256xi1> to vector<8x256xi1>
    %30 = vector.broadcast %cst_15 : f32 to vector<8x256xf32>
    %31 = arith.select %29, %27, %30 : vector<8x256xi1>, vector<8x256xf32>
    %32 = arith.mulf %31, %31 : vector<8x256xf32>
    %cst_16 = arith.constant dense<0.000000e+00> : vector<8xf32>
    %33 = vector.multi_reduction <add>, %32, %cst_16 [1] : vector<8x256xf32> to vector<8xf32>
    %34 = vector.shape_cast %33 : vector<8xf32> to vector<8x1xf32>
    %cst_17 = arith.constant 1.562500e-02 : f32
    %35 = vector.broadcast %cst_17 : f32 to vector<8x1xf32>
    %36 = arith.mulf %34, %35 : vector<8x1xf32>
    %cst_18 = arith.constant 9.99999974E-6 : f32
    %37 = vector.broadcast %cst_18 : f32 to vector<8x1xf32>
    %38 = arith.addf %36, %37 : vector<8x1xf32>
    %39 = math.rsqrt %38 : vector<8x1xf32>
    %40 = vector.broadcast %39 : vector<8x1xf32> to vector<8x256xf32>
    %41 = arith.mulf %31, %40 : vector<8x256xf32>
    %42 = vector.extract_strided_slice %12 {offsets = [0, 0], sizes = [8, 256], strides = [1, 1]} : vector<8x384xf32> to vector<8x256xf32>
    %cst_19 = arith.constant 0.000000e+00 : f32
    %43 = vector.shape_cast %16 : vector<1x256xi1> to vector<1x256xi1>
    %44 = vector.broadcast %43 : vector<1x256xi1> to vector<8x256xi1>
    %45 = vector.broadcast %cst_19 : f32 to vector<8x256xf32>
    %46 = arith.select %44, %42, %45 : vector<8x256xi1>, vector<8x256xf32>
    %cst_20 = arith.constant dense<0.000000e+00> : vector<8xf32>
    %47 = vector.multi_reduction <add>, %46, %cst_20 [1] : vector<8x256xf32> to vector<8xf32>
    %48 = vector.shape_cast %47 : vector<8xf32> to vector<8x1xf32>
    %cst_21 = arith.constant 1.562500e-02 : f32
    %49 = vector.broadcast %cst_21 : f32 to vector<8x1xf32>
    %50 = arith.mulf %48, %49 : vector<8x1xf32>
    %51 = vector.broadcast %50 : vector<8x1xf32> to vector<8x256xf32>
    %52 = arith.subf %46, %51 : vector<8x256xf32>
    %cst_22 = arith.constant 0.000000e+00 : f32
    %53 = vector.shape_cast %16 : vector<1x256xi1> to vector<1x256xi1>
    %54 = vector.broadcast %53 : vector<1x256xi1> to vector<8x256xi1>
    %55 = vector.broadcast %cst_22 : f32 to vector<8x256xf32>
    %56 = arith.select %54, %52, %55 : vector<8x256xi1>, vector<8x256xf32>
    %57 = arith.mulf %56, %56 : vector<8x256xf32>
    %cst_23 = arith.constant dense<0.000000e+00> : vector<8xf32>
    %58 = vector.multi_reduction <add>, %57, %cst_23 [1] : vector<8x256xf32> to vector<8xf32>
    %59 = vector.shape_cast %58 : vector<8xf32> to vector<8x1xf32>
    %cst_24 = arith.constant 1.562500e-02 : f32
    %60 = vector.broadcast %cst_24 : f32 to vector<8x1xf32>
    %61 = arith.mulf %59, %60 : vector<8x1xf32>
    %cst_25 = arith.constant 9.99999974E-6 : f32
    %62 = vector.broadcast %cst_25 : f32 to vector<8x1xf32>
    %63 = arith.addf %61, %62 : vector<8x1xf32>
    %64 = math.rsqrt %63 : vector<8x1xf32>
    %65 = vector.broadcast %64 : vector<8x1xf32> to vector<8x256xf32>
    %66 = arith.mulf %56, %65 : vector<8x256xf32>
    %67 = arith.addf %41, %66 : vector<8x256xf32>
    %68 = arith.negf %67 : vector<8x256xf32>
    %69 = math.exp %68 : vector<8x256xf32>
    %cst_26 = arith.constant 1.000000e+00 : f32
    %70 = vector.broadcast %cst_26 : f32 to vector<8x256xf32>
    %71 = arith.addf %70, %69 : vector<8x256xf32>
    %72 = arith.divf %70, %71 : vector<8x256xf32>
    %73 = vector.extract_strided_slice %72 {offsets = [0, 0], sizes = [8, 128], strides = [1, 1]} : vector<8x256xf32> to vector<8x128xf32>
    %74 = vector.extract_strided_slice %72 {offsets = [0, 128], sizes = [8, 128], strides = [1, 1]} : vector<8x256xf32> to vector<8x128xf32>
    %75 = vector.extract_strided_slice %6 {offsets = [0, 256], sizes = [8, 128], strides = [1, 1]} : vector<8x384xf32> to vector<8x128xf32>
    %cst_27 = arith.constant 0.000000e+00 : f32
    %76 = vector.shape_cast %15 : vector<1x128xi1> to vector<1x128xi1>
    %77 = vector.broadcast %76 : vector<1x128xi1> to vector<8x128xi1>
    %78 = vector.broadcast %cst_27 : f32 to vector<8x128xf32>
    %79 = arith.select %77, %75, %78 : vector<8x128xi1>, vector<8x128xf32>
    %cst_28 = arith.constant dense<0.000000e+00> : vector<8xf32>
    %80 = vector.multi_reduction <add>, %79, %cst_28 [1] : vector<8x128xf32> to vector<8xf32>
    %81 = vector.shape_cast %80 : vector<8xf32> to vector<8x1xf32>
    %cst_29 = arith.constant 3.125000e-02 : f32
    %82 = vector.broadcast %cst_29 : f32 to vector<8x1xf32>
    %83 = arith.mulf %81, %82 : vector<8x1xf32>
    %84 = vector.broadcast %83 : vector<8x1xf32> to vector<8x128xf32>
    %85 = arith.subf %79, %84 : vector<8x128xf32>
    %cst_30 = arith.constant 0.000000e+00 : f32
    %86 = vector.shape_cast %15 : vector<1x128xi1> to vector<1x128xi1>
    %87 = vector.broadcast %86 : vector<1x128xi1> to vector<8x128xi1>
    %88 = vector.broadcast %cst_30 : f32 to vector<8x128xf32>
    %89 = arith.select %87, %85, %88 : vector<8x128xi1>, vector<8x128xf32>
    %90 = arith.mulf %89, %89 : vector<8x128xf32>
    %cst_31 = arith.constant dense<0.000000e+00> : vector<8xf32>
    %91 = vector.multi_reduction <add>, %90, %cst_31 [1] : vector<8x128xf32> to vector<8xf32>
    %92 = vector.shape_cast %91 : vector<8xf32> to vector<8x1xf32>
    %cst_32 = arith.constant 3.125000e-02 : f32
    %93 = vector.broadcast %cst_32 : f32 to vector<8x1xf32>
    %94 = arith.mulf %92, %93 : vector<8x1xf32>
    %cst_33 = arith.constant 9.99999974E-6 : f32
    %95 = vector.broadcast %cst_33 : f32 to vector<8x1xf32>
    %96 = arith.addf %94, %95 : vector<8x1xf32>
    %97 = math.rsqrt %96 : vector<8x1xf32>
    %98 = vector.broadcast %97 : vector<8x1xf32> to vector<8x128xf32>
    %99 = arith.mulf %89, %98 : vector<8x128xf32>
    %100 = vector.extract_strided_slice %12 {offsets = [0, 256], sizes = [8, 128], strides = [1, 1]} : vector<8x384xf32> to vector<8x128xf32>
    %cst_34 = arith.constant 0.000000e+00 : f32
    %101 = vector.shape_cast %15 : vector<1x128xi1> to vector<1x128xi1>
    %102 = vector.broadcast %101 : vector<1x128xi1> to vector<8x128xi1>
    %103 = vector.broadcast %cst_34 : f32 to vector<8x128xf32>
    %104 = arith.select %102, %100, %103 : vector<8x128xi1>, vector<8x128xf32>
    %cst_35 = arith.constant dense<0.000000e+00> : vector<8xf32>
    %105 = vector.multi_reduction <add>, %104, %cst_35 [1] : vector<8x128xf32> to vector<8xf32>
    %106 = vector.shape_cast %105 : vector<8xf32> to vector<8x1xf32>
    %cst_36 = arith.constant 3.125000e-02 : f32
    %107 = vector.broadcast %cst_36 : f32 to vector<8x1xf32>
    %108 = arith.mulf %106, %107 : vector<8x1xf32>
    %109 = vector.broadcast %108 : vector<8x1xf32> to vector<8x128xf32>
    %110 = arith.subf %104, %109 : vector<8x128xf32>
    %cst_37 = arith.constant 0.000000e+00 : f32
    %111 = vector.shape_cast %15 : vector<1x128xi1> to vector<1x128xi1>
    %112 = vector.broadcast %111 : vector<1x128xi1> to vector<8x128xi1>
    %113 = vector.broadcast %cst_37 : f32 to vector<8x128xf32>
    %114 = arith.select %112, %110, %113 : vector<8x128xi1>, vector<8x128xf32>
    %115 = arith.mulf %114, %114 : vector<8x128xf32>
    %cst_38 = arith.constant dense<0.000000e+00> : vector<8xf32>
    %116 = vector.multi_reduction <add>, %115, %cst_38 [1] : vector<8x128xf32> to vector<8xf32>
    %117 = vector.shape_cast %116 : vector<8xf32> to vector<8x1xf32>
    %cst_39 = arith.constant 3.125000e-02 : f32
    %118 = vector.broadcast %cst_39 : f32 to vector<8x1xf32>
    %119 = arith.mulf %117, %118 : vector<8x1xf32>
    %cst_40 = arith.constant 9.99999974E-6 : f32
    %120 = vector.broadcast %cst_40 : f32 to vector<8x1xf32>
    %121 = arith.addf %119, %120 : vector<8x1xf32>
    %122 = math.rsqrt %121 : vector<8x1xf32>
    %123 = vector.broadcast %122 : vector<8x1xf32> to vector<8x128xf32>
    %124 = arith.mulf %114, %123 : vector<8x128xf32>
    %125 = arith.mulf %74, %124 : vector<8x128xf32>
    %126 = arith.addf %99, %125 : vector<8x128xf32>
    %127 = math.tanh %126 : vector<8x128xf32>
    %128 = arith.subf %127, %0 : vector<8x128xf32>
    %129 = arith.mulf %73, %128 : vector<8x128xf32>
    %130 = arith.addf %0, %129 : vector<8x128xf32>
    %c0_41 = arith.constant 0 : index
    %c0_42 = arith.constant 0 : index
    %131 = vector.load %arg7[%c0_41, %c0_42] : memref<8x128xf32, #tpu.memory_space<vmem>>, vector<8x128xf32>
    tpu.vector_store %arg7[%c0_41, %c0_42], %130 {strides = array<i32>} : memref<8x128xf32, #tpu.memory_space<vmem>>, vector<8x128xf32>,
    return
  }
  func.func @transform_0(%arg0: i32) -> (i32, i32) {
    %c0_i32 = arith.constant 0 : i32
    %c0_i32_0 = arith.constant 0 : i32
    return %arg0, %c0_i32 : i32, i32
  }
  func.func @transform_1(%arg0: i32) -> (i32, i32) {
    %c0_i32 = arith.constant 0 : i32
    %c0_i32_0 = arith.constant 0 : i32
    return %arg0, %c0_i32 : i32, i32
  }
  func.func @transform_2(%arg0: i32) -> (i32, i32) {
    %c0_i32 = arith.constant 0 : i32
    %c0_i32_0 = arith.constant 0 : i32
    %c0_i32_1 = arith.constant 0 : i32
    return %c0_i32, %c0_i32_0 : i32, i32
  }
  func.func @transform_3(%arg0: i32) -> (i32, i32) {
    %c0_i32 = arith.constant 0 : i32
    %c0_i32_0 = arith.constant 0 : i32
    %c0_i32_1 = arith.constant 0 : i32
    return %c0_i32, %c0_i32_0 : i32, i32
  }
  func.func @transform_4(%arg0: i32) -> (i32, i32) {
    %c0_i32 = arith.constant 0 : i32
    %c0_i32_0 = arith.constant 0 : i32
    %c0_i32_1 = arith.constant 0 : i32
    return %c0_i32, %c0_i32_0 : i32, i32
  }
  func.func @transform_5(%arg0: i32) -> (i32, i32) {
    %c0_i32 = arith.constant 0 : i32
    %c0_i32_0 = arith.constant 0 : i32
    %c0_i32_1 = arith.constant 0 : i32
    return %c0_i32, %c0_i32_0 : i32, i32
  }
  func.func @transform_6(%arg0: i32) -> (i32, i32) {
    %c0_i32 = arith.constant 0 : i32
    %c0_i32_0 = arith.constant 0 : i32
    return %arg0, %c0_i32 : i32, i32
  }
}

</mosaic_0001>

<llo_original>
// kernel: tpu_custom_call.1
$region0: #{tpu_custom_call.1}
  #allocation0 [shape = 'u32[]', space=smem, size = 0x4, offset = 0x4, fixed_abs, tag = 'smem constant byte address 0x4 - core index']
  #allocation1 [shape = 'u32[144,128]{1,0:T(1,128)}', space=vmem, size = 0x12000, scoped, tag = 'internal scratch']
  %s0 = inlined_call_operand.hbm [shape: bf16[8,16], index: 0, kind: input, shape index: {}]
  %s1 = inlined_call_operand.hbm [shape: f32[8,128], index: 1, kind: input, shape index: {}]
  %s2 = inlined_call_operand.hbm [shape: bf16[16,384], index: 2, kind: input, shape index: {}]
  %s3 = inlined_call_operand.vmem [shape: f32[1,384], index: 3, kind: input, shape index: {}]
  %s4 = inlined_call_operand.hbm [shape: bf16[128,384], index: 4, kind: input, shape index: {}]
  %s5 = inlined_call_operand.vmem [shape: f32[1,384], index: 5, kind: input, shape index: {}]
  %s6 = inlined_call_operand.hbm [shape: f32[8,128], index: 6, kind: output, shape index: {}]
  %s7 = sld [smem:[#allocation0]]
  $region50: #{tpu_custom_call.1} parent=0
    _
  %s9 = ssub.s32 1, %s7
  %s10 = scalar_select 0, %s9, %s7
  $region1: #{tpu_custom_call.1} parent=0
    #allocation2 [shape = 'u8[2048]{0}', space=vmem, size = 0x800, scoped, tag = 'input window, operand 0, single buffered']
    #allocation3 [shape = 's32[1]{0}', space=sflag, size = 0x4, scoped, tag = 'scoped memory for tpu_custom_call.1']
    #allocation4 [shape = 's32[1]{0}', space=sflag, size = 0x4, scoped, tag = 'scoped memory for tpu_custom_call.1']
    #allocation5 [shape = 'u8[4096]{0}', space=vmem, size = 0x1000, scoped, tag = 'input window, operand 1, single buffered']
    #allocation6 [shape = 's32[1]{0}', space=sflag, size = 0x4, scoped, tag = 'scoped memory for tpu_custom_call.1']
    #allocation7 [shape = 'u8[12288]{0}', space=vmem, size = 0x3000, scoped, tag = 'input window, operand 2, single buffered']
    #allocation8 [shape = 'u8[98304]{0}', space=vmem, size = 0x18000, scoped, tag = 'input window, operand 4, single buffered']
    #allocation9 [shape = 's32[1]{0}', space=sflag, size = 0x4, scoped, tag = 'scoped memory for tpu_custom_call.1']
    #allocation10 [shape = 'u8[4096]{0}', space=vmem, size = 0x1000, scoped, tag = 'output window, operand 0, single buffered']
    %11 = vsyncpa [#allocation3], 0
    %12 = vsyncpa [#allocation6], 0
    %13 = vsyncpa [#allocation9], 0
    %14 = vsyncpa [#allocation4], 0
    // Predicated region
    $region2: #{tpu_custom_call.1} parent=1 // pred_check
      _
    $region3: #{tpu_custom_call.1} parent=1 // pred_check_branch
      %16 = sbr.rel (0) target = $region5
    $region4: #{tpu_custom_call.1} parent=1 // pred_region
      %s18 = ssub.s32 64, 64
      %19 = vsyncadd [#allocation3], %s18
      %s21 = sshll.u32 [#allocation2], 4
      %s22 = int_to_ptr.vmem [resolvable:$true] %s21
      %24 = dma.hbm_to_vmem [thread:$0]  %s0, 64, %s22, [#allocation3]
    $region5: #{tpu_custom_call.1} parent=1 // pred_fallthru
      _
    // Predicated region
    $region6: #{tpu_custom_call.1} parent=1 // pred_check
      _
    $region7: #{tpu_custom_call.1} parent=1 // pred_check_branch
      %26 = sbr.rel (0) target = $region9
    $region8: #{tpu_custom_call.1} parent=1 // pred_region
      %s28 = ssub.s32 128, 128
      %29 = vsyncadd [#allocation6], %s28
      %s31 = sshll.u32 [#allocation5], 4
      %s32 = int_to_ptr.vmem [resolvable:$true] %s31
      %34 = dma.hbm_to_vmem [thread:$0]  %s1, 128, %s32, [#allocation6]
    $region9: #{tpu_custom_call.1} parent=1 // pred_fallthru
      _
    // Predicated region
    $region10: #{tpu_custom_call.1} parent=1 // pred_check
      _
    $region11: #{tpu_custom_call.1} parent=1 // pred_check_branch
      %36 = sbr.rel (0) target = $region13
    $region12: #{tpu_custom_call.1} parent=1 // pred_region
      %s38 = ssub.s32 384, 384
      %39 = vsyncadd [#allocation6], %s38
      %s40 = sshll.u32 [#allocation7], 4
      %s41 = int_to_ptr.vmem [resolvable:$true] %s40
      %46 = dma.hbm_to_vmem [thread:$0]  %s2, 384, %s41, [#allocation6], 192, 192, 12
    $region13: #{tpu_custom_call.1} parent=1 // pred_fallthru
      _
    // Predicated region
    $region14: #{tpu_custom_call.1} parent=1 // pred_check
      _
    $region15: #{tpu_custom_call.1} parent=1 // pred_check_branch
      %48 = sbr.rel (0) target = $region17
    $region16: #{tpu_custom_call.1} parent=1 // pred_region
      _
    $region17: #{tpu_custom_call.1} parent=1 // pred_fallthru
      _
    // Predicated region
    $region18: #{tpu_custom_call.1} parent=1 // pred_check
      _
    $region19: #{tpu_custom_call.1} parent=1 // pred_check_branch
      %50 = sbr.rel (0) target = $region21
    $region20: #{tpu_custom_call.1} parent=1 // pred_region
      %s52 = ssub.s32 3072, 3072
      %53 = vsyncadd [#allocation9], %s52
      %s54 = sshll.u32 [#allocation8], 4
      %s55 = int_to_ptr.vmem [resolvable:$true] %s54
      %60 = dma.hbm_to_vmem [thread:$0]  %s4, 3072, %s55, [#allocation9], 192, 192, 12
    $region21: #{tpu_custom_call.1} parent=1 // pred_fallthru
      _
    // Predicated region
    $region22: #{tpu_custom_call.1} parent=1 // pred_check
      _
    $region23: #{tpu_custom_call.1} parent=1 // pred_check_branch
      %62 = sbr.rel (0) target = $region25
    $region24: #{tpu_custom_call.1} parent=1 // pred_region
      _
    $region25: #{tpu_custom_call.1} parent=1 // pred_fallthru
      _
    // Predicated region
    $region26: #{tpu_custom_call.1} parent=1 // pred_check
      _
    $region27: #{tpu_custom_call.1} parent=1 // pred_check_branch
      %64 = sbr.rel (0) target = $region29
    $region28: #{tpu_custom_call.1} parent=1 // pred_region
      %65 = dma.done [#allocation3], 64
    $region29: #{tpu_custom_call.1} parent=1 // pred_fallthru
      _
    // Predicated region
    $region30: #{tpu_custom_call.1} parent=1 // pred_check
      _
    $region31: #{tpu_custom_call.1} parent=1 // pred_check_branch
      %67 = sbr.rel (0) target = $region33
    $region32: #{tpu_custom_call.1} parent=1 // pred_region
      %68 = dma.done [#allocation6], 128
    $region33: #{tpu_custom_call.1} parent=1 // pred_fallthru
      _
    // Predicated region
    $region34: #{tpu_custom_call.1} parent=1 // pred_check
      _
    $region35: #{tpu_custom_call.1} parent=1 // pred_check_branch
      %70 = sbr.rel (0) target = $region37
    $region36: #{tpu_custom_call.1} parent=1 // pred_region
      %71 = dma.done [#allocation6], 384
    $region37: #{tpu_custom_call.1} parent=1 // pred_fallthru
      _
    // Predicated region
    $region38: #{tpu_custom_call.1} parent=1 // pred_check
      _
    $region39: #{tpu_custom_call.1} parent=1 // pred_check_branch
      %73 = sbr.rel (0) target = $region41
    $region40: #{tpu_custom_call.1} parent=1 // pred_region
      %74 = dma.done [#allocation9], 3072
    $region41: #{tpu_custom_call.1} parent=1 // pred_fallthru
      _
    %v76 = vld [vmem:[#allocation5] sm:$0xff]
    %v77 = vld [vmem:[#allocation2] sm:$0xf]
    %v78 = vld [vmem:[#allocation7] sm:$0xff]
    %v79 = vld [vmem:[#allocation7 + $0x8] sm:$0xf]
    %v80 = vld [vmem:[#allocation7 + $0xc] sm:$0xff]
    %v81 = vld [vmem:[#allocation7 + $0x14] sm:$0xf]
    %v82 = vld [vmem:[%s3] sm:$0x7]
    %v84 = vlaneseq
    %v85 = vshrl.u32 %v84, 7
    %v86 = vsub.s32 0, %v85
    %v87 = vrot.slane %v82, %v86
    %v88 = vlaneseq
    %v89 = vshrl.u32 %v88, 7
    %v90 = vsub.s32 1, %v89
    %v91 = vrot.slane %v82, %v90
    %v92 = vlaneseq
    %v93 = vshrl.u32 %v92, 7
    %v94 = vsub.s32 2, %v93
    %v95 = vrot.slane %v82, %v94
    %v103 = vunpack.c.l.b16 %v78
    %v104 = vunpack.c.h.b16 %v78
    %v105 = vunpack.c.l.b16 %v79
    %v106 = vunpack.c.l.b16 %v80
    %v107 = vunpack.c.h.b16 %v80
    %v108 = vunpack.c.l.b16 %v81
    %v109 = vpack.c.b16 %v106, %v103
    %v110 = vpack.c.b16 %v107, %v104
    %v111 = vpack.c.b16 %v108, %v105
    %vm115 = vcmask 130048
    %v117 = vsel %vm115, %v77, 0
    %119 = vmatprep.subr.bf16.mxu0 0
    %120 = vmatpush1.bf16.msra.mxu0 0
    %121 = vmatprep.subr.bf16.mxu0 0
    %122 = vmatpush1.bf16.msra.mxu0 0
    %123 = vmatprep.subr.bf16.mxu0 0
    %124 = vmatpush1.bf16.msra.mxu0 0
    %125 = vmatprep.subr.bf16.mxu0 0
    %126 = vmatpush1.bf16.msra.mxu0 0
    %127 = vmatprep.subr.bf16.mxu0 0
    %128 = vmatpush1.bf16.msra.mxu0 0
    %129 = vmatprep.subr.bf16.mxu0 0
    %130 = vmatpush1.bf16.msra.mxu0 0
    %131 = vmatprep.subr.bf16.mxu0 0
    %132 = vmatpush1.bf16.msra.mxu0 0
    %133 = vmatprep.subr.bf16.mxu0 %v110
    %134 = vmatpush1.bf16.msra.mxu0 %v109
    %135 = vmatprep.subr.bf16.mxu0 0
    %136 = vmatpush2.bf16.msra.mxu0 0
    %137 = vmatprep.subr.bf16.mxu0 0
    %138 = vmatpush2.bf16.msra.mxu0 0
    %139 = vmatprep.subr.bf16.mxu0 0
    %140 = vmatpush2.bf16.msra.mxu0 0
    %141 = vmatprep.subr.bf16.mxu0 0
    %142 = vmatpush2.bf16.msra.mxu0 0
    %143 = vmatprep.subr.bf16.mxu0 0
    %144 = vmatpush2.bf16.msra.mxu0 0
    %145 = vmatprep.subr.bf16.mxu0 0
    %146 = vmatpush2.bf16.msra.mxu0 0
    %147 = vmatprep.subr.bf16.mxu0 0
    %148 = vmatpush2.bf16.msra.mxu0 0
    %149 = vmatprep.subr.bf16.mxu0 0
    %150 = vmatpush2.bf16.msra.mxu0 0
    %151 = vmatprep.mubr.bf16.mxu0 0
    %152 = vmatmul.mubr.bf16.gmra.mxu0 %v117
    %v153 = vpop.f32.mrf.mxu0
    %v154 = vadd.f32 %v87, %v153
    %v155 = vpop.f32.mrf.mxu0
    %v156 = vadd.f32 %v91, %v155
    %v157 = vpop.f32.mrf.mxu0
    %v158 = vpop.f32.mrf.mxu0
    %159 = vdwg.mxu0
    %160 = vmatprep.subr.bf16.mxu0 0
    %161 = vmatpush1.bf16.msra.mxu0 0
    %162 = vmatprep.subr.bf16.mxu0 0
    %163 = vmatpush1.bf16.msra.mxu0 0
    %164 = vmatprep.subr.bf16.mxu0 0
    %165 = vmatpush1.bf16.msra.mxu0 0
    %166 = vmatprep.subr.bf16.mxu0 0
    %167 = vmatpush1.bf16.msra.mxu0 0
    %168 = vmatprep.subr.bf16.mxu0 0
    %169 = vmatpush1.bf16.msra.mxu0 0
    %170 = vmatprep.subr.bf16.mxu0 0
    %171 = vmatpush1.bf16.msra.mxu0 0
    %172 = vmatprep.subr.bf16.mxu0 0
    %173 = vmatpush1.bf16.msra.mxu0 0
    %174 = vmatprep.subr.bf16.mxu0 0
    %175 = vmatpush1.bf16.msra.mxu0 %v111
    %176 = vmatprep.subr.bf16.mxu0 0
    %177 = vmatpush2.bf16.msra.mxu0 0
    %178 = vmatprep.subr.bf16.mxu0 0
    %179 = vmatpush2.bf16.msra.mxu0 0
    %180 = vmatprep.subr.bf16.mxu0 0
    %181 = vmatpush2.bf16.msra.mxu0 0
    %182 = vmatprep.subr.bf16.mxu0 0
    %183 = vmatpush2.bf16.msra.mxu0 0
    %184 = vmatprep.subr.bf16.mxu0 0
    %185 = vmatpush2.bf16.msra.mxu0 0
    %186 = vmatprep.subr.bf16.mxu0 0
    %187 = vmatpush2.bf16.msra.mxu0 0
    %188 = vmatprep.subr.bf16.mxu0 0
    %189 = vmatpush2.bf16.msra.mxu0 0
    %190 = vmatprep.subr.bf16.mxu0 0
    %191 = vmatpush2.bf16.msra.mxu0 0
    %192 = vmatprep.mubr.bf16.mxu0 0
    %193 = vmatmul.mubr.bf16.gmra.mxu0 %v117
    %v194 = vpop.f32.mrf.mxu0
    %v195 = vadd.f32 %v95, %v194
    %v196 = vpop.f32.mrf.mxu0
    %v197 = vpop.f32.mrf.mxu0
    %v198 = vpop.f32.mrf.mxu0
    %199 = vdwg.mxu0
    %v200 = vpack.c.bf16 %v76, %v76
    %v201 = vld [vmem:[#allocation8] sm:$0xff]
    %v202 = vld [vmem:[#allocation8 + $0x8] sm:$0xf]
    %v203 = vld [vmem:[#allocation8 + $0xc] sm:$0xff]
    %v204 = vld [vmem:[#allocation8 + $0x14] sm:$0xf]
    %v205 = vld [vmem:[#allocation8 + $0x18] sm:$0xff]
    %v206 = vld [vmem:[#allocation8 + $0x20] sm:$0xf]
    %v207 = vld [vmem:[#allocation8 + $0x24] sm:$0xff]
    %v208 = vld [vmem:[#allocation8 + $0x2c] sm:$0xf]
    %v209 = vld [vmem:[#allocation8 + $0x30] sm:$0xff]
    %v210 = vld [vmem:[#allocation8 + $0x38] sm:$0xf]
    %v211 = vld [vmem:[#allocation8 + $0x3c] sm:$0xff]
    %v212 = vld [vmem:[#allocation8 + $0x44] sm:$0xf]
    %v213 = vld [vmem:[#allocation8 + $0x48] sm:$0xff]
    %v214 = vld [vmem:[#allocation8 + $0x50] sm:$0xf]
    %v215 = vld [vmem:[#allocation8 + $0x54] sm:$0xff]
    %v216 = vld [vmem:[#allocation8 + $0x5c] sm:$0xf]
    %v217 = vld [vmem:[#allocation8 + $0x60] sm:$0xff]
    %v218 = vld [vmem:[#allocation8 + $0x68] sm:$0xf]
    %v219 = vld [vmem:[#allocation8 + $0x6c] sm:$0xff]
    %v220 = vld [vmem:[#allocation8 + $0x74] sm:$0xf]
    %v221 = vld [vmem:[#allocation8 + $0x78] sm:$0xff]
    %v222 = vld [vmem:[#allocation8 + $0x80] sm:$0xf]
    %v223 = vld [vmem:[#allocation8 + $0x84] sm:$0xff]
    %v224 = vld [vmem:[#allocation8 + $0x8c] sm:$0xf]
    %v225 = vld [vmem:[#allocation8 + $0x90] sm:$0xff]
    %v226 = vld [vmem:[#allocation8 + $0x98] sm:$0xf]
    %v227 = vld [vmem:[#allocation8 + $0x9c] sm:$0xff]
    %v228 = vld [vmem:[#allocation8 + $0xa4] sm:$0xf]
    %v229 = vld [vmem:[#allocation8 + $0xa8] sm:$0xff]
    %v230 = vld [vmem:[#allocation8 + $0xb0] sm:$0xf]
    %v231 = vld [vmem:[#allocation8 + $0xb4] sm:$0xff]
    %v232 = vld [vmem:[#allocation8 + $0xbc] sm:$0xf]
    %v233 = vld [vmem:[%s5] sm:$0x7]
    %v235 = vlaneseq
    %v236 = vshrl.u32 %v235, 7
    %v237 = vsub.s32 0, %v236
    %v238 = vrot.slane %v233, %v237
    %v239 = vlaneseq
    %v240 = vshrl.u32 %v239, 7
    %v241 = vsub.s32 1, %v240
    %v242 = vrot.slane %v233, %v241
    %v243 = vlaneseq
    %v244 = vshrl.u32 %v243, 7
    %v245 = vsub.s32 2, %v244
    %v246 = vrot.slane %v233, %v245
    %v282 = vunpack.c.l.b16 %v201
    %v283 = vunpack.c.h.b16 %v201
    %v284 = vunpack.c.l.b16 %v202
    %v285 = vunpack.c.l.b16 %v203
    %v286 = vunpack.c.h.b16 %v203
    %v287 = vunpack.c.l.b16 %v204
    %v288 = vunpack.c.l.b16 %v205
    %v289 = vunpack.c.h.b16 %v205
    %v290 = vunpack.c.l.b16 %v206
    %v291 = vunpack.c.l.b16 %v207
    %v292 = vunpack.c.h.b16 %v207
    %v293 = vunpack.c.l.b16 %v208
    %v294 = vunpack.c.l.b16 %v209
    %v295 = vunpack.c.h.b16 %v209
    %v296 = vunpack.c.l.b16 %v210
    %v297 = vunpack.c.l.b16 %v211
    %v298 = vunpack.c.h.b16 %v211
    %v299 = vunpack.c.l.b16 %v212
    %v300 = vunpack.c.l.b16 %v213
    %v301 = vunpack.c.h.b16 %v213
    %v302 = vunpack.c.l.b16 %v214
    %v303 = vunpack.c.l.b16 %v215
    %v304 = vunpack.c.h.b16 %v215
    %v305 = vunpack.c.l.b16 %v216
    %v306 = vunpack.c.l.b16 %v217
    %v307 = vunpack.c.h.b16 %v217
    %v308 = vunpack.c.l.b16 %v218
    %v309 = vunpack.c.l.b16 %v219
    %v310 = vunpack.c.h.b16 %v219
    %v311 = vunpack.c.l.b16 %v220
    %v312 = vunpack.c.l.b16 %v221
    %v313 = vunpack.c.h.b16 %v221
    %v314 = vunpack.c.l.b16 %v222
    %v315 = vunpack.c.l.b16 %v223
    %v316 = vunpack.c.h.b16 %v223
    %v317 = vunpack.c.l.b16 %v224
    %v318 = vunpack.c.l.b16 %v225
    %v319 = vunpack.c.h.b16 %v225
    %v320 = vunpack.c.l.b16 %v226
    %v321 = vunpack.c.l.b16 %v227
    %v322 = vunpack.c.h.b16 %v227
    %v323 = vunpack.c.l.b16 %v228
    %v324 = vunpack.c.l.b16 %v229
    %v325 = vunpack.c.h.b16 %v229
    %v326 = vunpack.c.l.b16 %v230
    %v327 = vunpack.c.l.b16 %v231
    %v328 = vunpack.c.h.b16 %v231
    %v329 = vunpack.c.l.b16 %v232
    %v330 = vpack.c.b16 %v285, %v282
    %v331 = vpack.c.b16 %v286, %v283
    %v332 = vpack.c.b16 %v287, %v284
    %v333 = vpack.c.b16 %v291, %v288
    %v334 = vpack.c.b16 %v292, %v289
    %v335 = vpack.c.b16 %v293, %v290
    %v336 = vpack.c.b16 %v297, %v294
    %v337 = vpack.c.b16 %v298, %v295
    %v338 = vpack.c.b16 %v299, %v296
    %v339 = vpack.c.b16 %v303, %v300
    %v340 = vpack.c.b16 %v304, %v301
    %v341 = vpack.c.b16 %v305, %v302
    %v342 = vpack.c.b16 %v309, %v306
    %v343 = vpack.c.b16 %v310, %v307
    %v344 = vpack.c.b16 %v311, %v308
    %v345 = vpack.c.b16 %v315, %v312
    %v346 = vpack.c.b16 %v316, %v313
    %v347 = vpack.c.b16 %v317, %v314
    %v348 = vpack.c.b16 %v321, %v318
    %v349 = vpack.c.b16 %v322, %v319
    %v350 = vpack.c.b16 %v323, %v320
    %v351 = vpack.c.b16 %v327, %v324
    %v352 = vpack.c.b16 %v328, %v325
    %v353 = vpack.c.b16 %v329, %v326
    %378 = vmatprep.subr.bf16.mxu0 %v352
    %379 = vmatpush1.bf16.msra.mxu0 %v351
    %380 = vmatprep.subr.bf16.mxu0 %v349
    %381 = vmatpush1.bf16.msra.mxu0 %v348
    %382 = vmatprep.subr.bf16.mxu0 %v346
    %383 = vmatpush1.bf16.msra.mxu0 %v345
    %384 = vmatprep.subr.bf16.mxu0 %v343
    %385 = vmatpush1.bf16.msra.mxu0 %v342
    %386 = vmatprep.subr.bf16.mxu0 %v340
    %387 = vmatpush1.bf16.msra.mxu0 %v339
    %388 = vmatprep.subr.bf16.mxu0 %v337
    %389 = vmatpush1.bf16.msra.mxu0 %v336
    %390 = vmatprep.subr.bf16.mxu0 %v334
    %391 = vmatpush1.bf16.msra.mxu0 %v333
    %392 = vmatprep.subr.bf16.mxu0 %v331
    %393 = vmatpush1.bf16.msra.mxu0 %v330
    %394 = vmatprep.subr.bf16.mxu0 0
    %395 = vmatpush2.bf16.msra.mxu0 0
    %396 = vmatprep.subr.bf16.mxu0 0
    %397 = vmatpush2.bf16.msra.mxu0 0
    %398 = vmatprep.subr.bf16.mxu0 0
    %399 = vmatpush2.bf16.msra.mxu0 0
    %400 = vmatprep.subr.bf16.mxu0 0
    %401 = vmatpush2.bf16.msra.mxu0 0
    %402 = vmatprep.subr.bf16.mxu0 0
    %403 = vmatpush2.bf16.msra.mxu0 0
    %404 = vmatprep.subr.bf16.mxu0 0
    %405 = vmatpush2.bf16.msra.mxu0 0
    %406 = vmatprep.subr.bf16.mxu0 0
    %407 = vmatpush2.bf16.msra.mxu0 0
    %408 = vmatprep.subr.bf16.mxu0 0
    %409 = vmatpush2.bf16.msra.mxu0 0
    %410 = vmatprep.mubr.bf16.mxu0 0
    %411 = vmatmul.mubr.bf16.gmra.mxu0 %v200
    %v412 = vpop.f32.mrf.mxu0
    %v413 = vadd.f32 %v238, %v412
    %v414 = vpop.f32.mrf.mxu0
    %v415 = vadd.f32 %v242, %v414
    %v416 = vpop.f32.mrf.mxu0
    %v417 = vpop.f32.mrf.mxu0
    %418 = vdwg.mxu0
    %419 = vmatprep.subr.bf16.mxu0 0
    %420 = vmatpush1.bf16.msra.mxu0 %v353
    %421 = vmatprep.subr.bf16.mxu0 0
    %422 = vmatpush1.bf16.msra.mxu0 %v350
    %423 = vmatprep.subr.bf16.mxu0 0
    %424 = vmatpush1.bf16.msra.mxu0 %v347
    %425 = vmatprep.subr.bf16.mxu0 0
    %426 = vmatpush1.bf16.msra.mxu0 %v344
    %427 = vmatprep.subr.bf16.mxu0 0
    %428 = vmatpush1.bf16.msra.mxu0 %v341
    %429 = vmatprep.subr.bf16.mxu0 0
    %430 = vmatpush1.bf16.msra.mxu0 %v338
    %431 = vmatprep.subr.bf16.mxu0 0
    %432 = vmatpush1.bf16.msra.mxu0 %v335
    %433 = vmatprep.subr.bf16.mxu0 0
    %434 = vmatpush1.bf16.msra.mxu0 %v332
    %435 = vmatprep.subr.bf16.mxu0 0
    %436 = vmatpush2.bf16.msra.mxu0 0
    %437 = vmatprep.subr.bf16.mxu0 0
    %438 = vmatpush2.bf16.msra.mxu0 0
    %439 = vmatprep.subr.bf16.mxu0 0
    %440 = vmatpush2.bf16.msra.mxu0 0
    %441 = vmatprep.subr.bf16.mxu0 0
    %442 = vmatpush2.bf16.msra.mxu0 0
    %443 = vmatprep.subr.bf16.mxu0 0
    %444 = vmatpush2.bf16.msra.mxu0 0
    %445 = vmatprep.subr.bf16.mxu0 0
    %446 = vmatpush2.bf16.msra.mxu0 0
    %447 = vmatprep.subr.bf16.mxu0 0
    %448 = vmatpush2.bf16.msra.mxu0 0
    %449 = vmatprep.subr.bf16.mxu0 0
    %450 = vmatpush2.bf16.msra.mxu0 0
    %451 = vmatprep.mubr.bf16.mxu0 0
    %452 = vmatmul.mubr.bf16.gmra.mxu0 %v200
    %v453 = vpop.f32.mrf.mxu0
    %v454 = vadd.f32 %v246, %v453
    %v455 = vpop.f32.mrf.mxu0
    %v456 = vpop.f32.mrf.mxu0
    %v457 = vpop.f32.mrf.mxu0
    %458 = vdwg.mxu0
    %v459 = vlaneseq
    %v460 = vand.u32 %v459, 127
    %vm461 = vcmp.lt.s32.totalorder %v460, 32
    %v462 = vsel %vm461, 1, 0
    %v463 = vlaneseq
    %v464 = vshrl.u32 %v463, 7
    %v465 = vsub.s32 0, %v464
    %v466 = vrot.slane %v462, %v465
    %vm467 = vcmp.eq.s32.totalorder %v466, 1
    %v468 = vsel %vm467, %v154, 0.0
    %v469 = vsel %vm467, %v156, 0.0
    %v470 = vadd.f32 %v468, %v469
    %471 = vadd.xlane.f32.xlu0 %v470
    %v472 = vpop.xlane.xlu0 %471
    %v473 = vmul.f32 %v472, 0.015625
    %v474 = vsub.f32 %v468, %v473
    %v475 = vsub.f32 %v469, %v473
    %v476 = vsel %vm467, %v474, 0.0
    %v477 = vsel %vm467, %v475, 0.0
    %v478 = vmul.f32 %v476, %v476
    %v479 = vmul.f32 %v477, %v477
    %v480 = vadd.f32 %v478, %v479
    %481 = vadd.xlane.f32.xlu0 %v480
    %v482 = vpop.xlane.xlu0 %481
    %v483 = vmul.f32 %v482, 0.015625
    %v484 = vadd.f32 %v483, 1e-05
    %v485 = vrsqrt.pop %v484
    %v486 = vmul.f32 %v476, %v485
    %v487 = vmul.f32 %v477, %v485
    %v488 = vsel %vm467, %v413, 0.0
    %v489 = vsel %vm467, %v415, 0.0
    %v490 = vadd.f32 %v488, %v489
    %491 = vadd.xlane.f32.xlu0 %v490
    %v492 = vpop.xlane.xlu0 %491
    %v493 = vmul.f32 %v492, 0.015625
    %v494 = vsub.f32 %v488, %v493
    %v495 = vsub.f32 %v489, %v493
    %v496 = vsel %vm467, %v494, 0.0
    %v497 = vsel %vm467, %v495, 0.0
    %v498 = vmul.f32 %v496, %v496
    %v499 = vmul.f32 %v497, %v497
    %v500 = vadd.f32 %v498, %v499
    %501 = vadd.xlane.f32.xlu0 %v500
    %v502 = vpop.xlane.xlu0 %501
    %v503 = vmul.f32 %v502, 0.015625
    %v504 = vadd.f32 %v503, 1e-05
    %v505 = vrsqrt.pop %v504
    %v506 = vmul.f32 %v496, %v505
    %v507 = vmul.f32 %v497, %v505
    %v508 = vadd.f32 %v486, %v506
    %v509 = vadd.f32 %v487, %v507
    %v510 = vxor.u32 %v508, 2147483648
    %v511 = vxor.u32 %v509, 2147483648
    %v512 = vmul.f32 %v510, 1.442695
    %v513 = vpow.pop %v512
    %v514 = vmul.f32 %v511, 1.442695
    %v515 = vpow.pop %v514
    %v516 = vadd.f32 %v513, 1.0
    %v517 = vadd.f32 %v515, 1.0
    %v518 = vrcp.pop %v516
    %v519 = vmul.f32 1.0, %v518
    %v520 = vrcp.pop %v517
    %v521 = vmul.f32 1.0, %v520
    %vm522 = vcmp.eq.s32.totalorder %v462, 1
    %v523 = vsel %vm522, %v195, 0.0
    %524 = vadd.xlane.f32.xlu0 %v523
    %v525 = vpop.xlane.xlu0 %524
    %v526 = vmul.f32 %v525, 0.03125
    %v527 = vsub.f32 %v523, %v526
    %v528 = vsel %vm522, %v527, 0.0
    %v529 = vmul.f32 %v528, %v528
    %530 = vadd.xlane.f32.xlu0 %v529
    %v531 = vpop.xlane.xlu0 %530
    %v532 = vmul.f32 %v531, 0.03125
    %v533 = vadd.f32 %v532, 1e-05
    %v534 = vrsqrt.pop %v533
    %v535 = vmul.f32 %v528, %v534
    %v536 = vsel %vm522, %v454, 0.0
    %537 = vadd.xlane.f32.xlu0 %v536
    %v538 = vpop.xlane.xlu0 %537
    %v539 = vmul.f32 %v538, 0.03125
    %v540 = vsub.f32 %v536, %v539
    %v541 = vsel %vm522, %v540, 0.0
    %v542 = vmul.f32 %v541, %v541
    %543 = vadd.xlane.f32.xlu0 %v542
    %v544 = vpop.xlane.xlu0 %543
    %v545 = vmul.f32 %v544, 0.03125
    %v546 = vadd.f32 %v545, 1e-05
    %v547 = vrsqrt.pop %v546
    %v548 = vmul.f32 %v541, %v547
    %v549 = vmul.f32 %v521, %v548
    %v550 = vadd.f32 %v535, %v549
    %v551 = vtanh.pop %v550
    %v552 = vsub.f32 %v551, %v76
    %v553 = vmul.f32 %v519, %v552
    %v554 = vadd.f32 %v76, %v553
    %555 = vst [vmem:[#allocation10] sm:$0xff] %v554
    // Predicated region
    $region42: #{tpu_custom_call.1} parent=1 // pred_check
      _
    $region43: #{tpu_custom_call.1} parent=1 // pred_check_branch
      %557 = sbr.rel (0) target = $region45
    $region44: #{tpu_custom_call.1} parent=1 // pred_region
      %s559 = ssub.s32 128, 128
      %560 = vsyncadd [#allocation4], %s559
      %s562 = sshll.u32 [#allocation10], 4
      %s563 = int_to_ptr.vmem [resolvable:$true] %s562
      %565 = dma.vmem_to_hbm [thread:$0]  %s563, 128, %s6, [#allocation4]
    $region45: #{tpu_custom_call.1} parent=1 // pred_fallthru
      _
    // Predicated region
    $region46: #{tpu_custom_call.1} parent=1 // pred_check
      _
    $region47: #{tpu_custom_call.1} parent=1 // pred_check_branch
      %567 = sbr.rel (0) target = $region49
    $region48: #{tpu_custom_call.1} parent=1 // pred_region
      %568 = dma.done [#allocation4], 128
    $region49: #{tpu_custom_call.1} parent=1 // pred_fallthru
      _
    %569 = vsyncpa [#allocation3], 1
    %570 = vsyncpa [#allocation6], 1
    %571 = vsyncpa [#allocation9], 1
    %572 = vsyncpa [#allocation4], 1

// kernel: tpu_custom_call.1
$region0: #{tpu_custom_call.1}
  #allocation0 [shape = 'u32[]', space=smem, size = 0x4, offset = 0x4, fixed_abs, tag = 'smem constant byte address 0x4 - core index']
  #allocation1 [shape = 'u32[144,128]{1,0:T(1,128)}', space=vmem, size = 0x12000, scoped, tag = 'internal scratch']
  %s0 = inlined_call_operand.hbm [shape: bf16[8,16], index: 0, kind: input, shape index: {}]
  %s1 = inlined_call_operand.hbm [shape: f32[8,128], index: 1, kind: input, shape index: {}]
  %s2 = inlined_call_operand.hbm [shape: bf16[16,384], index: 2, kind: input, shape index: {}]
  %s3 = inlined_call_operand.vmem [shape: f32[1,384], index: 3, kind: input, shape index: {}]
  %s4 = inlined_call_operand.hbm [shape: bf16[128,384], index: 4, kind: input, shape index: {}]
  %s5 = inlined_call_operand.vmem [shape: f32[1,384], index: 5, kind: input, shape index: {}]
  %s6 = inlined_call_operand.hbm [shape: f32[8,128], index: 6, kind: output, shape index: {}]
  %s7 = sld [smem:[#allocation0]]
  $region50: #{tpu_custom_call.1} parent=0
    _
  %s9 = ssub.s32 1, %s7
  %s10 = scalar_select 0, %s9, %s7
  $region1: #{tpu_custom_call.1} parent=0
    #allocation2 [shape = 'u8[2048]{0}', space=vmem, size = 0x800, scoped, tag = 'input window, operand 0, single buffered']
    #allocation3 [shape = 's32[1]{0}', space=sflag, size = 0x4, scoped, tag = 'scoped memory for tpu_custom_call.1']
    #allocation4 [shape = 's32[1]{0}', space=sflag, size = 0x4, scoped, tag = 'scoped memory for tpu_custom_call.1']
    #allocation5 [shape = 'u8[4096]{0}', space=vmem, size = 0x1000, scoped, tag = 'input window, operand 1, single buffered']
    #allocation6 [shape = 's32[1]{0}', space=sflag, size = 0x4, scoped, tag = 'scoped memory for tpu_custom_call.1']
    #allocation7 [shape = 'u8[12288]{0}', space=vmem, size = 0x3000, scoped, tag = 'input window, operand 2, single buffered']
    #allocation8 [shape = 'u8[98304]{0}', space=vmem, size = 0x18000, scoped, tag = 'input window, operand 4, single buffered']
    #allocation9 [shape = 's32[1]{0}', space=sflag, size = 0x4, scoped, tag = 'scoped memory for tpu_custom_call.1']
    #allocation10 [shape = 'u8[4096]{0}', space=vmem, size = 0x1000, scoped, tag = 'output window, operand 0, single buffered']
    %11 = vsyncpa [#allocation3], 0
    %12 = vsyncpa [#allocation6], 0
    %13 = vsyncpa [#allocation9], 0
    %14 = vsyncpa [#allocation4], 0
    // Predicated region
    $region2: #{tpu_custom_call.1} parent=1 // pred_check
      _
    $region3: #{tpu_custom_call.1} parent=1 // pred_check_branch
      %16 = sbr.rel (0) target = $region5
    $region4: #{tpu_custom_call.1} parent=1 // pred_region
      %s18 = ssub.s32 64, 64
      %19 = vsyncadd [#allocation3], %s18
      %s21 = sshll.u32 [#allocation2], 4
      %s22 = int_to_ptr.vmem [resolvable:$true] %s21
      %24 = dma.hbm_to_vmem [thread:$0]  %s0, 64, %s22, [#allocation3]
    $region5: #{tpu_custom_call.1} parent=1 // pred_fallthru
      _
    // Predicated region
    $region6: #{tpu_custom_call.1} parent=1 // pred_check
      _
    $region7: #{tpu_custom_call.1} parent=1 // pred_check_branch
      %26 = sbr.rel (0) target = $region9
    $region8: #{tpu_custom_call.1} parent=1 // pred_region
      %s28 = ssub.s32 128, 128
      %29 = vsyncadd [#allocation6], %s28
      %s31 = sshll.u32 [#allocation5], 4
      %s32 = int_to_ptr.vmem [resolvable:$true] %s31
      %34 = dma.hbm_to_vmem [thread:$0]  %s1, 128, %s32, [#allocation6]
    $region9: #{tpu_custom_call.1} parent=1 // pred_fallthru
      _
    // Predicated region
    $region10: #{tpu_custom_call.1} parent=1 // pred_check
      _
    $region11: #{tpu_custom_call.1} parent=1 // pred_check_branch
      %36 = sbr.rel (0) target = $region13
    $region12: #{tpu_custom_call.1} parent=1 // pred_region
      %s38 = ssub.s32 384, 384
      %39 = vsyncadd [#allocation6], %s38
      %s40 = sshll.u32 [#allocation7], 4
      %s41 = int_to_ptr.vmem [resolvable:$true] %s40
      %46 = dma.hbm_to_vmem [thread:$0]  %s2, 384, %s41, [#allocation6], 192, 192, 12
    $region13: #{tpu_custom_call.1} parent=1 // pred_fallthru
      _
    // Predicated region
    $region14: #{tpu_custom_call.1} parent=1 // pred_check
      _
    $region15: #{tpu_custom_call.1} parent=1 // pred_check_branch
      %48 = sbr.rel (0) target = $region17
    $region16: #{tpu_custom_call.1} parent=1 // pred_region
      _
    $region17: #{tpu_custom_call.1} parent=1 // pred_fallthru
      _
    // Predicated region
    $region18: #{tpu_custom_call.1} parent=1 // pred_check
      _
    $region19: #{tpu_custom_call.1} parent=1 // pred_check_branch
      %50 = sbr.rel (0) target = $region21
    $region20: #{tpu_custom_call.1} parent=1 // pred_region
      %s52 = ssub.s32 3072, 3072
      %53 = vsyncadd [#allocation9], %s52
      %s54 = sshll.u32 [#allocation8], 4
      %s55 = int_to_ptr.vmem [resolvable:$true] %s54
      %60 = dma.hbm_to_vmem [thread:$0]  %s4, 3072, %s55, [#allocation9], 192, 192, 12
    $region21: #{tpu_custom_call.1} parent=1 // pred_fallthru
      _
    // Predicated region
    $region22: #{tpu_custom_call.1} parent=1 // pred_check
      _
    $region23: #{tpu_custom_call.1} parent=1 // pred_check_branch
      %62 = sbr.rel (0) target = $region25
    $region24: #{tpu_custom_call.1} parent=1 // pred_region
      _
    $region25: #{tpu_custom_call.1} parent=1 // pred_fallthru
      _
    // Predicated region
    $region26: #{tpu_custom_call.1} parent=1 // pred_check
      _
    $region27: #{tpu_custom_call.1} parent=1 // pred_check_branch
      %64 = sbr.rel (0) target = $region29
    $region28: #{tpu_custom_call.1} parent=1 // pred_region
      %65 = dma.done [#allocation3], 64
    $region29: #{tpu_custom_call.1} parent=1 // pred_fallthru
      _
    // Predicated region
    $region30: #{tpu_custom_call.1} parent=1 // pred_check
      _
    $region31: #{tpu_custom_call.1} parent=1 // pred_check_branch
      %67 = sbr.rel (0) target = $region33
    $region32: #{tpu_custom_call.1} parent=1 // pred_region
      %68 = dma.done [#allocation6], 128
    $region33: #{tpu_custom_call.1} parent=1 // pred_fallthru
      _
    // Predicated region
    $region34: #{tpu_custom_call.1} parent=1 // pred_check
      _
    $region35: #{tpu_custom_call.1} parent=1 // pred_check_branch
      %70 = sbr.rel (0) target = $region37
    $region36: #{tpu_custom_call.1} parent=1 // pred_region
      %71 = dma.done [#allocation6], 384
    $region37: #{tpu_custom_call.1} parent=1 // pred_fallthru
      _
    // Predicated region
    $region38: #{tpu_custom_call.1} parent=1 // pred_check
      _
    $region39: #{tpu_custom_call.1} parent=1 // pred_check_branch
      %73 = sbr.rel (0) target = $region41
    $region40: #{tpu_custom_call.1} parent=1 // pred_region
      %74 = dma.done [#allocation9], 3072
    $region41: #{tpu_custom_call.1} parent=1 // pred_fallthru
      _
    %v76 = vld [vmem:[#allocation5] sm:$0xff]
    %v77 = vld [vmem:[#allocation2] sm:$0xf]
    %v78 = vld [vmem:[#allocation7] sm:$0xff]
    %v79 = vld [vmem:[#allocation7 + $0x8] sm:$0xf]
    %v80 = vld [vmem:[#allocation7 + $0xc] sm:$0xff]
    %v81 = vld [vmem:[#allocation7 + $0x14] sm:$0xf]
    %v82 = vld [vmem:[%s3] sm:$0x7]
    %v84 = vlaneseq
    %v85 = vshrl.u32 %v84, 7
    %v86 = vsub.s32 0, %v85
    %v87 = vrot.slane %v82, %v86
    %v88 = vlaneseq
    %v89 = vshrl.u32 %v88, 7
    %v90 = vsub.s32 1, %v89
    %v91 = vrot.slane %v82, %v90
    %v92 = vlaneseq
    %v93 = vshrl.u32 %v92, 7
    %v94 = vsub.s32 2, %v93
    %v95 = vrot.slane %v82, %v94
    %v103 = vunpack.c.l.b16 %v78
    %v104 = vunpack.c.h.b16 %v78
    %v105 = vunpack.c.l.b16 %v79
    %v106 = vunpack.c.l.b16 %v80
    %v107 = vunpack.c.h.b16 %v80
    %v108 = vunpack.c.l.b16 %v81
    %v109 = vpack.c.b16 %v106, %v103
    %v110 = vpack.c.b16 %v107, %v104
    %v111 = vpack.c.b16 %v108, %v105
    %vm115 = vcmask 130048
    %v117 = vsel %vm115, %v77, 0
    %119 = vmatprep.subr.bf16.mxu0 0
    %120 = vmatpush1.bf16.msra.mxu0 0
    %121 = vmatprep.subr.bf16.mxu0 0
    %122 = vmatpush1.bf16.msra.mxu0 0
    %123 = vmatprep.subr.bf16.mxu0 0
    %124 = vmatpush1.bf16.msra.mxu0 0
    %125 = vmatprep.subr.bf16.mxu0 0
    %126 = vmatpush1.bf16.msra.mxu0 0
    %127 = vmatprep.subr.bf16.mxu0 0
    %128 = vmatpush1.bf16.msra.mxu0 0
    %129 = vmatprep.subr.bf16.mxu0 0
    %130 = vmatpush1.bf16.msra.mxu0 0
    %131 = vmatprep.subr.bf16.mxu0 0
    %132 = vmatpush1.bf16.msra.mxu0 0
    %133 = vmatprep.subr.bf16.mxu0 %v110
    %134 = vmatpush1.bf16.msra.mxu0 %v109
    %135 = vmatprep.subr.bf16.mxu0 0
    %136 = vmatpush2.bf16.msra.mxu0 0
    %137 = vmatprep.subr.bf16.mxu0 0
    %138 = vmatpush2.bf16.msra.mxu0 0
    %139 = vmatprep.subr.bf16.mxu0 0
    %140 = vmatpush2.bf16.msra.mxu0 0
    %141 = vmatprep.subr.bf16.mxu0 0
    %142 = vmatpush2.bf16.msra.mxu0 0
    %143 = vmatprep.subr.bf16.mxu0 0
    %144 = vmatpush2.bf16.msra.mxu0 0
    %145 = vmatprep.subr.bf16.mxu0 0
    %146 = vmatpush2.bf16.msra.mxu0 0
    %147 = vmatprep.subr.bf16.mxu0 0
    %148 = vmatpush2.bf16.msra.mxu0 0
    %149 = vmatprep.subr.bf16.mxu0 0
    %150 = vmatpush2.bf16.msra.mxu0 0
    %151 = vmatprep.mubr.bf16.mxu0 0
    %152 = vmatmul.mubr.bf16.gmra.mxu0 %v117
    %v153 = vpop.f32.mrf.mxu0
    %v154 = vadd.f32 %v87, %v153
    %v155 = vpop.f32.mrf.mxu0
    %v156 = vadd.f32 %v91, %v155
    %v157 = vpop.f32.mrf.mxu0
    %v158 = vpop.f32.mrf.mxu0
    %159 = vdwg.mxu0
    %160 = vmatprep.subr.bf16.mxu0 0
    %161 = vmatpush1.bf16.msra.mxu0 0
    %162 = vmatprep.subr.bf16.mxu0 0
    %163 = vmatpush1.bf16.msra.mxu0 0
    %164 = vmatprep.subr.bf16.mxu0 0
    %165 = vmatpush1.bf16.msra.mxu0 0
    %166 = vmatprep.subr.bf16.mxu0 0
    %167 = vmatpush1.bf16.msra.mxu0 0
    %168 = vmatprep.subr.bf16.mxu0 0
    %169 = vmatpush1.bf16.msra.mxu0 0
    %170 = vmatprep.subr.bf16.mxu0 0
    %171 = vmatpush1.bf16.msra.mxu0 0
    %172 = vmatprep.subr.bf16.mxu0 0
    %173 = vmatpush1.bf16.msra.mxu0 0
    %174 = vmatprep.subr.bf16.mxu0 0
    %175 = vmatpush1.bf16.msra.mxu0 %v111
    %176 = vmatprep.subr.bf16.mxu0 0
    %177 = vmatpush2.bf16.msra.mxu0 0
    %178 = vmatprep.subr.bf16.mxu0 0
    %179 = vmatpush2.bf16.msra.mxu0 0
    %180 = vmatprep.subr.bf16.mxu0 0
    %181 = vmatpush2.bf16.msra.mxu0 0
    %182 = vmatprep.subr.bf16.mxu0 0
    %183 = vmatpush2.bf16.msra.mxu0 0
    %184 = vmatprep.subr.bf16.mxu0 0
    %185 = vmatpush2.bf16.msra.mxu0 0
    %186 = vmatprep.subr.bf16.mxu0 0
    %187 = vmatpush2.bf16.msra.mxu0 0
    %188 = vmatprep.subr.bf16.mxu0 0
    %189 = vmatpush2.bf16.msra.mxu0 0
    %190 = vmatprep.subr.bf16.mxu0 0
    %191 = vmatpush2.bf16.msra.mxu0 0
    %192 = vmatprep.mubr.bf16.mxu0 0
    %193 = vmatmul.mubr.bf16.gmra.mxu0 %v117
    %v194 = vpop.f32.mrf.mxu0
    %v195 = vadd.f32 %v95, %v194
    %v196 = vpop.f32.mrf.mxu0
    %v197 = vpop.f32.mrf.mxu0
    %v198 = vpop.f32.mrf.mxu0
    %199 = vdwg.mxu0
    %v200 = vpack.c.bf16 %v76, %v76
    %v201 = vld [vmem:[#allocation8] sm:$0xff]
    %v202 = vld [vmem:[#allocation8 + $0x8] sm:$0xf]
    %v203 = vld [vmem:[#allocation8 + $0xc] sm:$0xff]
    %v204 = vld [vmem:[#allocation8 + $0x14] sm:$0xf]
    %v205 = vld [vmem:[#allocation8 + $0x18] sm:$0xff]
    %v206 = vld [vmem:[#allocation8 + $0x20] sm:$0xf]
    %v207 = vld [vmem:[#allocation8 + $0x24] sm:$0xff]
    %v208 = vld [vmem:[#allocation8 + $0x2c] sm:$0xf]
    %v209 = vld [vmem:[#allocation8 + $0x30] sm:$0xff]
    %v210 = vld [vmem:[#allocation8 + $0x38] sm:$0xf]
    %v211 = vld [vmem:[#allocation8 + $0x3c] sm:$0xff]
    %v212 = vld [vmem:[#allocation8 + $0x44] sm:$0xf]
    %v213 = vld [vmem:[#allocation8 + $0x48] sm:$0xff]
    %v214 = vld [vmem:[#allocation8 + $0x50] sm:$0xf]
    %v215 = vld [vmem:[#allocation8 + $0x54] sm:$0xff]
    %v216 = vld [vmem:[#allocation8 + $0x5c] sm:$0xf]
    %v217 = vld [vmem:[#allocation8 + $0x60] sm:$0xff]
    %v218 = vld [vmem:[#allocation8 + $0x68] sm:$0xf]
    %v219 = vld [vmem:[#allocation8 + $0x6c] sm:$0xff]
    %v220 = vld [vmem:[#allocation8 + $0x74] sm:$0xf]
    %v221 = vld [vmem:[#allocation8 + $0x78] sm:$0xff]
    %v222 = vld [vmem:[#allocation8 + $0x80] sm:$0xf]
    %v223 = vld [vmem:[#allocation8 + $0x84] sm:$0xff]
    %v224 = vld [vmem:[#allocation8 + $0x8c] sm:$0xf]
    %v225 = vld [vmem:[#allocation8 + $0x90] sm:$0xff]
    %v226 = vld [vmem:[#allocation8 + $0x98] sm:$0xf]
    %v227 = vld [vmem:[#allocation8 + $0x9c] sm:$0xff]
    %v228 = vld [vmem:[#allocation8 + $0xa4] sm:$0xf]
    %v229 = vld [vmem:[#allocation8 + $0xa8] sm:$0xff]
    %v230 = vld [vmem:[#allocation8 + $0xb0] sm:$0xf]
    %v231 = vld [vmem:[#allocation8 + $0xb4] sm:$0xff]
    %v232 = vld [vmem:[#allocation8 + $0xbc] sm:$0xf]
    %v233 = vld [vmem:[%s5] sm:$0x7]
    %v235 = vlaneseq
    %v236 = vshrl.u32 %v235, 7
    %v237 = vsub.s32 0, %v236
    %v238 = vrot.slane %v233, %v237
    %v239 = vlaneseq
    %v240 = vshrl.u32 %v239, 7
    %v241 = vsub.s32 1, %v240
    %v242 = vrot.slane %v233, %v241
    %v243 = vlaneseq
    %v244 = vshrl.u32 %v243, 7
    %v245 = vsub.s32 2, %v244
    %v246 = vrot.slane %v233, %v245
    %v282 = vunpack.c.l.b16 %v201
    %v283 = vunpack.c.h.b16 %v201
    %v284 = vunpack.c.l.b16 %v202
    %v285 = vunpack.c.l.b16 %v203
    %v286 = vunpack.c.h.b16 %v203
    %v287 = vunpack.c.l.b16 %v204
    %v288 = vunpack.c.l.b16 %v205
    %v289 = vunpack.c.h.b16 %v205
    %v290 = vunpack.c.l.b16 %v206
    %v291 = vunpack.c.l.b16 %v207
    %v292 = vunpack.c.h.b16 %v207
    %v293 = vunpack.c.l.b16 %v208
    %v294 = vunpack.c.l.b16 %v209
    %v295 = vunpack.c.h.b16 %v209
    %v296 = vunpack.c.l.b16 %v210
    %v297 = vunpack.c.l.b16 %v211
    %v298 = vunpack.c.h.b16 %v211
    %v299 = vunpack.c.l.b16 %v212
    %v300 = vunpack.c.l.b16 %v213
    %v301 = vunpack.c.h.b16 %v213
    %v302 = vunpack.c.l.b16 %v214
    %v303 = vunpack.c.l.b16 %v215
    %v304 = vunpack.c.h.b16 %v215
    %v305 = vunpack.c.l.b16 %v216
    %v306 = vunpack.c.l.b16 %v217
    %v307 = vunpack.c.h.b16 %v217
    %v308 = vunpack.c.l.b16 %v218
    %v309 = vunpack.c.l.b16 %v219
    %v310 = vunpack.c.h.b16 %v219
    %v311 = vunpack.c.l.b16 %v220
    %v312 = vunpack.c.l.b16 %v221
    %v313 = vunpack.c.h.b16 %v221
    %v314 = vunpack.c.l.b16 %v222
    %v315 = vunpack.c.l.b16 %v223
    %v316 = vunpack.c.h.b16 %v223
    %v317 = vunpack.c.l.b16 %v224
    %v318 = vunpack.c.l.b16 %v225
    %v319 = vunpack.c.h.b16 %v225
    %v320 = vunpack.c.l.b16 %v226
    %v321 = vunpack.c.l.b16 %v227
    %v322 = vunpack.c.h.b16 %v227
    %v323 = vunpack.c.l.b16 %v228
    %v324 = vunpack.c.l.b16 %v229
    %v325 = vunpack.c.h.b16 %v229
    %v326 = vunpack.c.l.b16 %v230
    %v327 = vunpack.c.l.b16 %v231
    %v328 = vunpack.c.h.b16 %v231
    %v329 = vunpack.c.l.b16 %v232
    %v330 = vpack.c.b16 %v285, %v282
    %v331 = vpack.c.b16 %v286, %v283
    %v332 = vpack.c.b16 %v287, %v284
    %v333 = vpack.c.b16 %v291, %v288
    %v334 = vpack.c.b16 %v292, %v289
    %v335 = vpack.c.b16 %v293, %v290
    %v336 = vpack.c.b16 %v297, %v294
    %v337 = vpack.c.b16 %v298, %v295
    %v338 = vpack.c.b16 %v299, %v296
    %v339 = vpack.c.b16 %v303, %v300
    %v340 = vpack.c.b16 %v304, %v301
    %v341 = vpack.c.b16 %v305, %v302
    %v342 = vpack.c.b16 %v309, %v306
    %v343 = vpack.c.b16 %v310, %v307
    %v344 = vpack.c.b16 %v311, %v308
    %v345 = vpack.c.b16 %v315, %v312
    %v346 = vpack.c.b16 %v316, %v313
    %v347 = vpack.c.b16 %v317, %v314
    %v348 = vpack.c.b16 %v321, %v318
    %v349 = vpack.c.b16 %v322, %v319
    %v350 = vpack.c.b16 %v323, %v320
    %v351 = vpack.c.b16 %v327, %v324
    %v352 = vpack.c.b16 %v328, %v325
    %v353 = vpack.c.b16 %v329, %v326
    %378 = vmatprep.subr.bf16.mxu0 %v352
    %379 = vmatpush1.bf16.msra.mxu0 %v351
    %380 = vmatprep.subr.bf16.mxu0 %v349
    %381 = vmatpush1.bf16.msra.mxu0 %v348
    %382 = vmatprep.subr.bf16.mxu0 %v346
    %383 = vmatpush1.bf16.msra.mxu0 %v345
    %384 = vmatprep.subr.bf16.mxu0 %v343
    %385 = vmatpush1.bf16.msra.mxu0 %v342
    %386 = vmatprep.subr.bf16.mxu0 %v340
    %387 = vmatpush1.bf16.msra.mxu0 %v339
    %388 = vmatprep.subr.bf16.mxu0 %v337
    %389 = vmatpush1.bf16.msra.mxu0 %v336
    %390 = vmatprep.subr.bf16.mxu0 %v334
    %391 = vmatpush1.bf16.msra.mxu0 %v333
    %392 = vmatprep.subr.bf16.mxu0 %v331
    %393 = vmatpush1.bf16.msra.mxu0 %v330
    %394 = vmatprep.subr.bf16.mxu0 0
    %395 = vmatpush2.bf16.msra.mxu0 0
    %396 = vmatprep.subr.bf16.mxu0 0
    %397 = vmatpush2.bf16.msra.mxu0 0
    %398 = vmatprep.subr.bf16.mxu0 0
    %399 = vmatpush2.bf16.msra.mxu0 0
    %400 = vmatprep.subr.bf16.mxu0 0
    %401 = vmatpush2.bf16.msra.mxu0 0
    %402 = vmatprep.subr.bf16.mxu0 0
    %403 = vmatpush2.bf16.msra.mxu0 0
    %404 = vmatprep.subr.bf16.mxu0 0
    %405 = vmatpush2.bf16.msra.mxu0 0
    %406 = vmatprep.subr.bf16.mxu0 0
    %407 = vmatpush2.bf16.msra.mxu0 0
    %408 = vmatprep.subr.bf16.mxu0 0
    %409 = vmatpush2.bf16.msra.mxu0 0
    %410 = vmatprep.mubr.bf16.mxu0 0
    %411 = vmatmul.mubr.bf16.gmra.mxu0 %v200
    %v412 = vpop.f32.mrf.mxu0
    %v413 = vadd.f32 %v238, %v412
    %v414 = vpop.f32.mrf.mxu0
    %v415 = vadd.f32 %v242, %v414
    %v416 = vpop.f32.mrf.mxu0
    %v417 = vpop.f32.mrf.mxu0
    %418 = vdwg.mxu0
    %419 = vmatprep.subr.bf16.mxu0 0
    %420 = vmatpush1.bf16.msra.mxu0 %v353
    %421 = vmatprep.subr.bf16.mxu0 0
    %422 = vmatpush1.bf16.msra.mxu0 %v350
    %423 = vmatprep.subr.bf16.mxu0 0
    %424 = vmatpush1.bf16.msra.mxu0 %v347
    %425 = vmatprep.subr.bf16.mxu0 0
    %426 = vmatpush1.bf16.msra.mxu0 %v344
    %427 = vmatprep.subr.bf16.mxu0 0
    %428 = vmatpush1.bf16.msra.mxu0 %v341
    %429 = vmatprep.subr.bf16.mxu0 0
    %430 = vmatpush1.bf16.msra.mxu0 %v338
    %431 = vmatprep.subr.bf16.mxu0 0
    %432 = vmatpush1.bf16.msra.mxu0 %v335
    %433 = vmatprep.subr.bf16.mxu0 0
    %434 = vmatpush1.bf16.msra.mxu0 %v332
    %435 = vmatprep.subr.bf16.mxu0 0
    %436 = vmatpush2.bf16.msra.mxu0 0
    %437 = vmatprep.subr.bf16.mxu0 0
    %438 = vmatpush2.bf16.msra.mxu0 0
    %439 = vmatprep.subr.bf16.mxu0 0
    %440 = vmatpush2.bf16.msra.mxu0 0
    %441 = vmatprep.subr.bf16.mxu0 0
    %442 = vmatpush2.bf16.msra.mxu0 0
    %443 = vmatprep.subr.bf16.mxu0 0
    %444 = vmatpush2.bf16.msra.mxu0 0
    %445 = vmatprep.subr.bf16.mxu0 0
    %446 = vmatpush2.bf16.msra.mxu0 0
    %447 = vmatprep.subr.bf16.mxu0 0
    %448 = vmatpush2.bf16.msra.mxu0 0
    %449 = vmatprep.subr.bf16.mxu0 0
    %450 = vmatpush2.bf16.msra.mxu0 0
    %451 = vmatprep.mubr.bf16.mxu0 0
    %452 = vmatmul.mubr.bf16.gmra.mxu0 %v200
    %v453 = vpop.f32.mrf.mxu0
    %v454 = vadd.f32 %v246, %v453
    %v455 = vpop.f32.mrf.mxu0
    %v456 = vpop.f32.mrf.mxu0
    %v457 = vpop.f32.mrf.mxu0
    %458 = vdwg.mxu0
    %v459 = vlaneseq
    %v460 = vand.u32 %v459, 127
    %vm461 = vcmp.lt.s32.totalorder %v460, 32
    %v462 = vsel %vm461, 1, 0
    %v463 = vlaneseq
    %v464 = vshrl.u32 %v463, 7
    %v465 = vsub.s32 0, %v464
    %v466 = vrot.slane %v462, %v465
    %vm467 = vcmp.eq.s32.totalorder %v466, 1
    %v468 = vsel %vm467, %v154, 0.0
    %v469 = vsel %vm467, %v156, 0.0
    %v470 = vadd.f32 %v468, %v469
    %471 = vadd.xlane.f32.xlu0 %v470
    %v472 = vpop.xlane.xlu0 %471
    %v473 = vmul.f32 %v472, 0.015625
    %v474 = vsub.f32 %v468, %v473
    %v475 = vsub.f32 %v469, %v473
    %v476 = vsel %vm467, %v474, 0.0
    %v477 = vsel %vm467, %v475, 0.0
    %v478 = vmul.f32 %v476, %v476
    %v479 = vmul.f32 %v477, %v477
    %v480 = vadd.f32 %v478, %v479
    %481 = vadd.xlane.f32.xlu0 %v480
    %v482 = vpop.xlane.xlu0 %481
    %v483 = vmul.f32 %v482, 0.015625
    %v484 = vadd.f32 %v483, 1e-05
    %v485 = vrsqrt.pop %v484
    %v486 = vmul.f32 %v476, %v485
    %v487 = vmul.f32 %v477, %v485
    %v488 = vsel %vm467, %v413, 0.0
    %v489 = vsel %vm467, %v415, 0.0
    %v490 = vadd.f32 %v488, %v489
    %491 = vadd.xlane.f32.xlu0 %v490
    %v492 = vpop.xlane.xlu0 %491
    %v493 = vmul.f32 %v492, 0.015625
    %v494 = vsub.f32 %v488, %v493
    %v495 = vsub.f32 %v489, %v493
    %v496 = vsel %vm467, %v494, 0.0
    %v497 = vsel %vm467, %v495, 0.0
    %v498 = vmul.f32 %v496, %v496
    %v499 = vmul.f32 %v497, %v497
    %v500 = vadd.f32 %v498, %v499
    %501 = vadd.xlane.f32.xlu0 %v500
    %v502 = vpop.xlane.xlu0 %501
    %v503 = vmul.f32 %v502, 0.015625
    %v504 = vadd.f32 %v503, 1e-05
    %v505 = vrsqrt.pop %v504
    %v506 = vmul.f32 %v496, %v505
    %v507 = vmul.f32 %v497, %v505
    %v508 = vadd.f32 %v486, %v506
    %v509 = vadd.f32 %v487, %v507
    %v510 = vxor.u32 %v508, 2147483648
    %v511 = vxor.u32 %v509, 2147483648
    %v512 = vmul.f32 %v510, 1.442695
    %v513 = vpow.pop %v512
    %v514 = vmul.f32 %v511, 1.442695
    %v515 = vpow.pop %v514
    %v516 = vadd.f32 %v513, 1.0
    %v517 = vadd.f32 %v515, 1.0
    %v518 = vrcp.pop %v516
    %v519 = vmul.f32 1.0, %v518
    %v520 = vrcp.pop %v517
    %v521 = vmul.f32 1.0, %v520
    %vm522 = vcmp.eq.s32.totalorder %v462, 1
    %v523 = vsel %vm522, %v195, 0.0
    %524 = vadd.xlane.f32.xlu0 %v523
    %v525 = vpop.xlane.xlu0 %524
    %v526 = vmul.f32 %v525, 0.03125
    %v527 = vsub.f32 %v523, %v526
    %v528 = vsel %vm522, %v527, 0.0
    %v529 = vmul.f32 %v528, %v528
    %530 = vadd.xlane.f32.xlu0 %v529
    %v531 = vpop.xlane.xlu0 %530
    %v532 = vmul.f32 %v531, 0.03125
    %v533 = vadd.f32 %v532, 1e-05
    %v534 = vrsqrt.pop %v533
    %v535 = vmul.f32 %v528, %v534
    %v536 = vsel %vm522, %v454, 0.0
    %537 = vadd.xlane.f32.xlu0 %v536
    %v538 = vpop.xlane.xlu0 %537
    %v539 = vmul.f32 %v538, 0.03125
    %v540 = vsub.f32 %v536, %v539
    %v541 = vsel %vm522, %v540, 0.0
    %v542 = vmul.f32 %v541, %v541
    %543 = vadd.xlane.f32.xlu0 %v542
    %v544 = vpop.xlane.xlu0 %543
    %v545 = vmul.f32 %v544, 0.03125
    %v546 = vadd.f32 %v545, 1e-05
    %v547 = vrsqrt.pop %v546
    %v548 = vmul.f32 %v541, %v547
    %v549 = vmul.f32 %v521, %v548
    %v550 = vadd.f32 %v535, %v549
    %v551 = vtanh.pop %v550
    %v552 = vsub.f32 %v551, %v76
    %v553 = vmul.f32 %v519, %v552
    %v554 = vadd.f32 %v76, %v553
    %555 = vst [vmem:[#allocation10] sm:$0xff] %v554
    // Predicated region
    $region42: #{tpu_custom_call.1} parent=1 // pred_check
      _
    $region43: #{tpu_custom_call.1} parent=1 // pred_check_branch
      %557 = sbr.rel (0) target = $region45
    $region44: #{tpu_custom_call.1} parent=1 // pred_region
      %s559 = ssub.s32 128, 128
      %560 = vsyncadd [#allocation4], %s559
      %s562 = sshll.u32 [#allocation10], 4
      %s563 = int_to_ptr.vmem [resolvable:$true] %s562
      %565 = dma.vmem_to_hbm [thread:$0]  %s563, 128, %s6, [#allocation4]
    $region45: #{tpu_custom_call.1} parent=1 // pred_fallthru
      _
    // Predicated region
    $region46: #{tpu_custom_call.1} parent=1 // pred_check
      _
    $region47: #{tpu_custom_call.1} parent=1 // pred_check_branch
      %567 = sbr.rel (0) target = $region49
    $region48: #{tpu_custom_call.1} parent=1 // pred_region
      %568 = dma.done [#allocation4], 128
    $region49: #{tpu_custom_call.1} parent=1 // pred_fallthru
      _
    %569 = vsyncpa [#allocation3], 1
    %570 = vsyncpa [#allocation6], 1
    %571 = vsyncpa [#allocation9], 1
    %572 = vsyncpa [#allocation4], 1

</llo_original>
